<compile_context>
chip_gen: v7x
topology: tpu7x:2x2x1
jax: 0.10.0
libtpu: 0.0.40
codegen_flags: <defaults>
</compile_context>

<pallas_src>
import functools

import jax
import jax.numpy as jnp
from jax import lax
from jax.experimental import pallas as pl
from jax.experimental.pallas import tpu as pltpu


# ---------------------------------------------------------------------------
# helpers
# ---------------------------------------------------------------------------
def _round_up(x, m):
    return (x + m - 1) // m * m


def _pad_gate_cols(w, h, hp):
    """(..., 4h) -> (..., 4hp): each PyTorch gate block [i, f, g, o] is zero-padded
    from h to hp columns so in-kernel gate slices fall on 128-lane boundaries."""
    if h == hp:
        return w
    parts = []
    for k in range(4):
        blk = w[..., k * h:(k + 1) * h]
        pad = [(0, 0)] * (w.ndim - 1) + [(0, hp - h)]
        parts.append(jnp.pad(blk, pad))
    return jnp.concatenate(parts, axis=-1)


# ---------------------------------------------------------------------------
# Kernel 1: LSTM recurrence, streamed over T-chunks
# ---------------------------------------------------------------------------
def lstm_kernel(x_ref, wih_ref, whh_ref, b_ref, h0_ref, c0_ref,
                hs_ref, hn_ref, cn_ref,
                xp_scr, h_scr, c_scr,
                *, t_chunk, seq_len, batch_pad, hidden_pad, needs_mask, unroll):
    """One grid step = one chunk of `t_chunk` timesteps.

    x_ref:   (t_chunk*Bp, E)   bf16 embedded inputs for this chunk (time-major rows)
    wih_ref: (E, 4Hp)   bf16   W_ih^T, gate order [i, f, g, o], gate-block padded
    whh_ref: (Hp, 4Hp)  bf16   W_hh^T
    b_ref:   (1, 4Hp)   f32    b_ih + b_hh (gate-block padded)
    h0/c0:   (Bp, Hp)   f32    initial states
    hs_ref:  (t_chunk*Bp, Hp)  f32 per-timestep hidden states (output)
    hn/cn:   (Bp, Hp)   f32    final states (output)
    xp_scr:  (t_chunk*Bp, 4Hp) f32 VMEM scratch for the hoisted input projection
    h_scr/c_scr: (Bp, Hp) f32  VMEM carry across grid steps
    """
    Hp = hidden_pad
    Bp = batch_pad
    tc = pl.program_id(0)

    @pl.when(tc == 0)
    def _():
        h_scr[...] = h0_ref[...]
        c_scr[...] = c0_ref[...]

    # Hoisted input projection for the whole chunk: one MXU-shaped matmul with the
    # bias broadcast folded in once (not re-materialized every timestep).
    xp_scr[...] = (jnp.dot(x_ref[...], wih_ref[...],
                           preferred_element_type=jnp.float32)
                   + b_ref[...])

    whh = whh_ref[...]  # hoist the (Hp, 4Hp) bf16 load out of the loop

    def step(t, carry):
        h, c = carry
        row0 = pl.multiple_of(t * Bp, 8)
        gates = xp_scr[pl.ds(row0, Bp), :] + jnp.dot(
            h.astype(whh.dtype), whh, preferred_element_type=jnp.float32)
        i = jax.nn.sigmoid(gates[:, 0 * Hp:1 * Hp])
        f = jax.nn.sigmoid(gates[:, 1 * Hp:2 * Hp])
        g = jnp.tanh(gates[:, 2 * Hp:3 * Hp])
        o = jax.nn.sigmoid(gates[:, 3 * Hp:4 * Hp])
        c_new = f * c + i * g
        h_new = o * jnp.tanh(c_new)
        hs_ref[pl.ds(row0, Bp), :] = h_new
        if needs_mask:  # only when T was padded up to a multiple of t_chunk
            valid = (tc * t_chunk + t) < seq_len
            h_new = jnp.where(valid, h_new, h)
            c_new = jnp.where(valid, c_new, c)
        return (h_new, c_new)

    h, c = lax.fori_loop(0, t_chunk, step, (h_scr[...], c_scr[...]),
                         unroll=unroll)
    h_scr[...] = h
    c_scr[...] = c
    hn_ref[...] = h
    cn_ref[...] = c


# ---------------------------------------------------------------------------
# Kernel 2: output projection (B*T, H) @ (H, V) + b, tiled & parallel
# ---------------------------------------------------------------------------
def fc_kernel(h_ref, w_ref, b_ref, o_ref):
    o_ref[...] = (jnp.dot(h_ref[...], w_ref[...],
                          preferred_element_type=jnp.float32)
                  + b_ref[...])


# ---------------------------------------------------------------------------
# Forward pass (glue + pallas_calls)
# ---------------------------------------------------------------------------
def rnn_forward(params, x_ids, hc):
    h0, c0 = hc                                  # (1, B, H) each (num_layers = 1)
    B, T = x_ids.shape
    E = params["embed"].shape[1]
    H = params["w_hh"].shape[1]                  # w_hh: (4H, H)
    V = params["w_fc"].shape[0]                  # w_fc: (V, H)

    Bp = _round_up(B, 8)                         # f32 sublanes
    Hp = _round_up(H, 128)                       # lanes (gate blocks lane-aligned)
    Vp = _round_up(V, 128)                       # lane-dense logits

    t_chunk = T if T <= 16 else 16               # small static chunk -> full unroll
    n_chunks = pl.cdiv(T, t_chunk)
    Tp = n_chunks * t_chunk

    # ---- pack / pad operands (bf16 weights for the MXU, f32 biases & states) ----
    wih = _pad_gate_cols(params["w_ih"].T, H, Hp).astype(jnp.bfloat16)       # (E, 4Hp)
    whh = _pad_gate_cols(params["w_hh"].T, H, Hp)                            # (H, 4Hp)
    whh = jnp.pad(whh, ((0, Hp - H), (0, 0))).astype(jnp.bfloat16)           # (Hp, 4Hp)
    b = _pad_gate_cols((params["b_ih"] + params["b_hh"])[None, :], H, Hp)    # (1, 4Hp)
    wfc = jnp.pad(params["w_fc"].T,
                  ((0, Hp - H), (0, Vp - V))).astype(jnp.bfloat16)           # (Hp, Vp)
    bfc = jnp.pad(params["b_fc"][None, :], ((0, 0), (0, Vp - V)))            # (1, Vp)

    h0p = jnp.pad(h0[0], ((0, Bp - B), (0, Hp - H)))                         # (Bp, Hp)
    c0p = jnp.pad(c0[0], ((0, Bp - B), (0, Hp - H)))

    # Embedding lookup stays in XLA glue; time-major, bf16, padded.
    x_emb = jnp.take(params["embed"], x_ids, axis=0).astype(jnp.bfloat16)    # (B, T, E)
    x_tm = jnp.transpose(x_emb, (1, 0, 2))                                   # (T, B, E)
    x_tm = jnp.pad(x_tm, ((0, Tp - T), (0, Bp - B), (0, 0)))                 # (Tp, Bp, E)
    x2d = x_tm.reshape(Tp * Bp, E)                                           # (Tp*Bp, E)

    kernel = functools.partial(
        lstm_kernel, t_chunk=t_chunk, seq_len=T, batch_pad=Bp, hidden_pad=Hp,
        needs_mask=(Tp != T), unroll=True)

    hs, h_n, c_n = pl.pallas_call(
        kernel,
        out_shape=(jax.ShapeDtypeStruct((Tp * Bp, Hp), jnp.float32),
                   jax.ShapeDtypeStruct((Bp, Hp), jnp.float32),
                   jax.ShapeDtypeStruct((Bp, Hp), jnp.float32)),
        grid_spec=pltpu.PrefetchScalarGridSpec(
            num_scalar_prefetch=0,
            grid=(n_chunks,),
            in_specs=[
                pl.BlockSpec((t_chunk * Bp, E), lambda tc: (tc, 0)),   # streamed x
                pl.BlockSpec((E, 4 * Hp), lambda tc: (0, 0)),          # resident W_ih
                pl.BlockSpec((Hp, 4 * Hp), lambda tc: (0, 0)),         # resident W_hh
                pl.BlockSpec((1, 4 * Hp), lambda tc: (0, 0)),          # resident bias
                pl.BlockSpec((Bp, Hp), lambda tc: (0, 0)),             # h0
                pl.BlockSpec((Bp, Hp), lambda tc: (0, 0)),             # c0
            ],
            out_specs=(
                pl.BlockSpec((t_chunk * Bp, Hp), lambda tc: (tc, 0)),  # streamed hs
                pl.BlockSpec((Bp, Hp), lambda tc: (0, 0)),             # h_n
                pl.BlockSpec((Bp, Hp), lambda tc: (0, 0)),             # c_n
            ),
            scratch_shapes=[
                pltpu.VMEM((t_chunk * Bp, 4 * Hp), jnp.float32),       # x-projection
                pltpu.VMEM((Bp, Hp), jnp.float32),                     # h carry
                pltpu.VMEM((Bp, Hp), jnp.float32),                     # c carry
            ]),
        compiler_params=pltpu.CompilerParams(
            dimension_semantics=("arbitrary",)),                       # serial over T
    )(x2d, wih, whh, b, h0p, c0p)

    # Rows in PyTorch's (b*T + t) order; only the H-wide tensor is transposed
    # (the V-wide logits are written directly in the right layout below).
    hs_tb = hs.reshape(Tp, Bp, Hp)[:T, :B, :]
    hs_bt = jnp.transpose(hs_tb, (1, 0, 2)).reshape(B * T, Hp).astype(jnp.bfloat16)

    R = B * T
    tile_r = min(256, _round_up(R, 8))
    Rp = _round_up(R, tile_r)
    if Vp % 512 == 0:
        tile_v = 512
    elif Vp % 256 == 0:
        tile_v = 256
    else:
        tile_v = 128
    hs_bt = jnp.pad(hs_bt, ((0, Rp - R), (0, 0)))

    logits = pl.pallas_call(
        fc_kernel,
        out_shape=jax.ShapeDtypeStruct((Rp, Vp), jnp.float32),
        grid_spec=pltpu.PrefetchScalarGridSpec(
            num_scalar_prefetch=0,
            grid=(Rp // tile_r, Vp // tile_v),
            in_specs=[
                pl.BlockSpec((tile_r, Hp), lambda r, v: (r, 0)),
                pl.BlockSpec((Hp, tile_v), lambda r, v: (0, v)),
                pl.BlockSpec((1, tile_v), lambda r, v: (0, v)),
            ],
            out_specs=pl.BlockSpec((tile_r, tile_v), lambda r, v: (r, v))),
        compiler_params=pltpu.CompilerParams(
            dimension_semantics=("parallel", "parallel")),
    )(hs_bt, wfc, bfc)

    out = logits[:R, :V]
    return out, (h_n[:B, :H][None], c_n[:B, :H][None])


# ---------------------------------------------------------------------------
# Pure-JAX reference (same bf16 quantization points as the kernel path)
# ---------------------------------------------------------------------------
def rnn_forward_ref(params, x_ids, hc):
    h0, c0 = hc
    B, T = x_ids.shape
    H = params["w_hh"].shape[1]
    wih = params["w_ih"].T.astype(jnp.bfloat16)       # (E, 4H)
    whh = params["w_hh"].T.astype(jnp.bfloat16)       # (H, 4H)
    b = (params["b_ih"] + params["b_hh"])[None, :]
    wfc = params["w_fc"].T.astype(jnp.bfloat16)       # (H, V)
    bfc = params["b_fc"][None, :]

    x_emb = jnp.take(params["embed"], x_ids, axis=0).astype(jnp.bfloat16)  # (B, T, E)
    x_tm = jnp.transpose(x_emb, (1, 0, 2))                                 # (T, B, E)

    def step(carry, x_t):
        h, c = carry
        gates = (jnp.dot(x_t, wih, preferred_element_type=jnp.float32)
                 + jnp.dot(h.astype(jnp.bfloat16), whh,
                           preferred_element_type=jnp.float32) + b)
        i = jax.nn.sigmoid(gates[:, 0 * H:1 * H])
        f = jax.nn.sigmoid(gates[:, 1 * H:2 * H])
        g = jnp.tanh(gates[:, 2 * H:3 * H])
        o = jax.nn.sigmoid(gates[:, 3 * H:4 * H])
        c_new = f * c + i * g
        h_new = o * jnp.tanh(c_new)
        return (h_new, c_new), h_new

    (h_n, c_n), hs = lax.scan(step, (h0[0], c0[0]), x_tm)   # hs: (T, B, H) f32
    out = jnp.transpose(hs, (1, 0, 2)).reshape(B * T, H)
    out = (jnp.dot(out.astype(jnp.bfloat16), wfc,
                   preferred_element_type=jnp.float32) + bfc)
    return out, (h_n[None], c_n[None])


# ---------------------------------------------------------------------------
# Parameter init (PyTorch-equivalent raw layout)
# ---------------------------------------------------------------------------
def init_params(key, vocab_size, hidden_size, embed_size):
    ks = jax.random.split(key, 7)
    scale = 1.0 / jnp.sqrt(jnp.float32(hidden_size))
    u = lambda k, shape: jax.random.uniform(k, shape, jnp.float32, -scale, scale)
    return {
        "embed": jax.random.normal(ks[0], (vocab_size, embed_size), jnp.float32) * 0.1,
        "w_ih": u(ks[1], (4 * hidden_size, embed_size)),   # PyTorch weight_ih_l0
        "w_hh": u(ks[2], (4 * hidden_size, hidden_size)),  # PyTorch weight_hh_l0
        "b_ih": u(ks[3], (4 * hidden_size,)),
        "b_hh": u(ks[4], (4 * hidden_size,)),
        "w_fc": u(ks[5], (vocab_size, hidden_size)),       # PyTorch fc.weight
        "b_fc": u(ks[6], (vocab_size,)),
    }


if __name__ == "__main__":
    vocab_size, hidden_size, embed_size = 32, 32, 16
    B, T = 2, 8

    key = jax.random.PRNGKey(0)
    k_param, k_x, k_h, k_c = jax.random.split(key, 4)
    params = init_params(k_param, vocab_size, hidden_size, embed_size)

    x_ids = jax.random.randint(k_x, (B, T), 0, vocab_size, dtype=jnp.int32)
    h0 = jax.random.normal(k_h, (1, B, hidden_size), jnp.float32) * 0.1
    c0 = jax.random.normal(k_c, (1, B, hidden_size), jnp.float32) * 0.1

    fwd = jax.jit(rnn_forward)
    out, (h_n, c_n) = fwd(params, x_ids, (h0, c0))
    jax.block_until_ready((out, h_n, c_n))

    out_r, (h_r, c_r) = rnn_forward_ref(params, x_ids, (h0, c0))
    assert out.shape == (B * T, vocab_size)
    assert h_n.shape == (1, B, hidden_size) and c_n.shape == (1, B, hidden_size)
    assert jnp.allclose(out, out_r, atol=1e-3, rtol=1e-3), \
        float(jnp.max(jnp.abs(out - out_r)))
    assert jnp.allclose(h_n, h_r, atol=1e-3, rtol=1e-3)
    assert jnp.allclose(c_n, c_r, atol=1e-3, rtol=1e-3)

    print("KERNEL_OK")
</pallas_src>

<mosaic_0001>
module attributes {stable_mosaic.version = 11 : i64} {
  func.func @fc_kernel(%arg0: i32, %arg1: i32, %arg2: memref<16x128xbf16, #tpu.memory_space<vmem>>, %arg3: memref<128x128xbf16, #tpu.memory_space<vmem>>, %arg4: memref<1x128xf32, #tpu.memory_space<vmem>>, %arg5: memref<16x128xf32, #tpu.memory_space<vmem>>) attributes {dimension_semantics = [#tpu.dimension_semantics<parallel>, #tpu.dimension_semantics<parallel>], iteration_bounds = array<i64: 1, 1>, scalar_prefetch = 0 : i64, scratch_operands = 0 : i64, tpu.core_type = #tpu.core_type<tc>, window_params = [{transform_indices = @transform_0, window_bounds = array<i64: 16, 128>}, {transform_indices = @transform_1, window_bounds = array<i64: 128, 128>}, {transform_indices = @transform_2, window_bounds = array<i64: 1, 128>}, {transform_indices = @transform_3, window_bounds = array<i64: 16, 128>}]} {
    %c0 = arith.constant 0 : index
    %c0_0 = arith.constant 0 : index
    %0 = vector.load %arg2[%c0, %c0_0] : memref<16x128xbf16, #tpu.memory_space<vmem>>, vector<16x128xbf16>
    %c0_1 = arith.constant 0 : index
    %c0_2 = arith.constant 0 : index
    %1 = vector.load %arg3[%c0_1, %c0_2] : memref<128x128xbf16, #tpu.memory_space<vmem>>, vector<128x128xbf16>
    %cst = arith.constant dense<0.000000e+00> : vector<16x128xf32>
    %2 = tpu.matmul %0, %1, %cst {dimension_numbers = #tpu.dot_dimension_numbers<[1], [0], [0], [1], [0, 0, 1, 1], [], []>} : vector<16x128xbf16>, vector<128x128xbf16>, vector<16x128xf32> -> vector<16x128xf32>
    %c0_3 = arith.constant 0 : index
    %c0_4 = arith.constant 0 : index
    %3 = vector.load %arg4[%c0_3, %c0_4] : memref<1x128xf32, #tpu.memory_space<vmem>>, vector<1x128xf32>
    %4 = vector.broadcast %3 : vector<1x128xf32> to vector<16x128xf32>
    %5 = arith.addf %2, %4 : vector<16x128xf32>
    %c0_5 = arith.constant 0 : index
    %c0_6 = arith.constant 0 : index
    %6 = vector.load %arg5[%c0_5, %c0_6] : memref<16x128xf32, #tpu.memory_space<vmem>>, vector<16x128xf32>
    tpu.vector_store %arg5[%c0_5, %c0_6], %5 {strides = array<i32>} : memref<16x128xf32, #tpu.memory_space<vmem>>, vector<16x128xf32>,
    return
  }
  func.func @transform_0(%arg0: i32, %arg1: i32) -> (i32, i32) {
    %c0_i32 = arith.constant 0 : i32
    %c0_i32_0 = arith.constant 0 : i32
    return %arg0, %c0_i32 : i32, i32
  }
  func.func @transform_1(%arg0: i32, %arg1: i32) -> (i32, i32) {
    %c0_i32 = arith.constant 0 : i32
    %c0_i32_0 = arith.constant 0 : i32
    return %c0_i32, %arg1 : i32, i32
  }
  func.func @transform_2(%arg0: i32, %arg1: i32) -> (i32, i32) {
    %c0_i32 = arith.constant 0 : i32
    %c0_i32_0 = arith.constant 0 : i32
    return %c0_i32, %arg1 : i32, i32
  }
  func.func @transform_3(%arg0: i32, %arg1: i32) -> (i32, i32) {
    %c0_i32 = arith.constant 0 : i32
    return %arg0, %arg1 : i32, i32
  }
}

module attributes {stable_mosaic.version = 11 : i64} {
  func.func @lstm_kernel(%arg0: i32, %arg1: memref<64x16xbf16, #tpu.memory_space<vmem>>, %arg2: memref<16x512xbf16, #tpu.memory_space<vmem>>, %arg3: memref<128x512xbf16, #tpu.memory_space<vmem>>, %arg4: memref<1x512xf32, #tpu.memory_space<vmem>>, %arg5: memref<8x128xf32, #tpu.memory_space<vmem>>, %arg6: memref<8x128xf32, #tpu.memory_space<vmem>>, %arg7: memref<64x128xf32, #tpu.memory_space<vmem>>, %arg8: memref<8x128xf32, #tpu.memory_space<vmem>>, %arg9: memref<8x128xf32, #tpu.memory_space<vmem>>, %arg10: memref<64x512xf32, #tpu.memory_space<vmem>>, %arg11: memref<8x128xf32, #tpu.memory_space<vmem>>, %arg12: memref<8x128xf32, #tpu.memory_space<vmem>>) attributes {dimension_semantics = [#tpu.dimension_semantics<arbitrary>], iteration_bounds = array<i64: 1>, scalar_prefetch = 0 : i64, scratch_operands = 3 : i64, tpu.core_type = #tpu.core_type<tc>, window_params = [{transform_indices = @transform_0, window_bounds = array<i64: 64, 16>}, {pipeline_mode = #tpu.pipeline_mode<synchronous>, transform_indices = @transform_1, window_bounds = array<i64: 16, 512>}, {pipeline_mode = #tpu.pipeline_mode<synchronous>, transform_indices = @transform_2, window_bounds = array<i64: 128, 512>}, {pipeline_mode = #tpu.pipeline_mode<synchronous>, transform_indices = @transform_3, window_bounds = array<i64: 1, 512>}, {pipeline_mode = #tpu.pipeline_mode<synchronous>, transform_indices = @transform_4, window_bounds = array<i64: 8, 128>}, {pipeline_mode = #tpu.pipeline_mode<synchronous>, transform_indices = @transform_5, window_bounds = array<i64: 8, 128>}, {transform_indices = @transform_6, window_bounds = array<i64: 64, 128>}, {pipeline_mode = #tpu.pipeline_mode<synchronous>, transform_indices = @transform_7, window_bounds = array<i64: 8, 128>}, {pipeline_mode = #tpu.pipeline_mode<synchronous>, transform_indices = @transform_8, window_bounds = array<i64: 8, 128>}]} {
    %c0_i32 = arith.constant 0 : i32
    %0 = arith.cmpi eq, %arg0, %c0_i32 : i32
    %1 = arith.extui %0 : i1 to i32
    %c0_i32_0 = arith.constant 0 : i32
    %2 = arith.cmpi ne, %1, %c0_i32_0 : i32
    scf.if %2 {
      %c0_79 = arith.constant 0 : index
      %c0_80 = arith.constant 0 : index
      %289 = vector.load %arg5[%c0_79, %c0_80] : memref<8x128xf32, #tpu.memory_space<vmem>>, vector<8x128xf32>
      %c0_81 = arith.constant 0 : index
      %c0_82 = arith.constant 0 : index
      %290 = vector.load %arg11[%c0_81, %c0_82] : memref<8x128xf32, #tpu.memory_space<vmem>>, vector<8x128xf32>
      tpu.vector_store %arg11[%c0_81, %c0_82], %289 {strides = array<i32>} : memref<8x128xf32, #tpu.memory_space<vmem>>, vector<8x128xf32>,
      %c0_83 = arith.constant 0 : index
      %c0_84 = arith.constant 0 : index
      %291 = vector.load %arg6[%c0_83, %c0_84] : memref<8x128xf32, #tpu.memory_space<vmem>>, vector<8x128xf32>
      %c0_85 = arith.constant 0 : index
      %c0_86 = arith.constant 0 : index
      %292 = vector.load %arg12[%c0_85, %c0_86] : memref<8x128xf32, #tpu.memory_space<vmem>>, vector<8x128xf32>
      tpu.vector_store %arg12[%c0_85, %c0_86], %291 {strides = array<i32>} : memref<8x128xf32, #tpu.memory_space<vmem>>, vector<8x128xf32>,
    } else {
    }
    %c0 = arith.constant 0 : index
    %c0_1 = arith.constant 0 : index
    %3 = vector.load %arg1[%c0, %c0_1] : memref<64x16xbf16, #tpu.memory_space<vmem>>, vector<64x16xbf16>
    %c0_2 = arith.constant 0 : index
    %c0_3 = arith.constant 0 : index
    %4 = vector.load %arg2[%c0_2, %c0_3] : memref<16x512xbf16, #tpu.memory_space<vmem>>, vector<16x512xbf16>
    %cst = arith.constant dense<0.000000e+00> : vector<64x512xf32>
    %5 = tpu.matmul %3, %4, %cst {dimension_numbers = #tpu.dot_dimension_numbers<[1], [0], [0], [1], [0, 0, 1, 1], [], []>} : vector<64x16xbf16>, vector<16x512xbf16>, vector<64x512xf32> -> vector<64x512xf32>
    %c0_4 = arith.constant 0 : index
    %c0_5 = arith.constant 0 : index
    %6 = vector.load %arg4[%c0_4, %c0_5] : memref<1x512xf32, #tpu.memory_space<vmem>>, vector<1x512xf32>
    %7 = vector.broadcast %6 : vector<1x512xf32> to vector<64x512xf32>
    %8 = arith.addf %5, %7 : vector<64x512xf32>
    %c0_6 = arith.constant 0 : index
    %c0_7 = arith.constant 0 : index
    %9 = vector.load %arg10[%c0_6, %c0_7] : memref<64x512xf32, #tpu.memory_space<vmem>>, vector<64x512xf32>
    tpu.vector_store %arg10[%c0_6, %c0_7], %8 {strides = array<i32>} : memref<64x512xf32, #tpu.memory_space<vmem>>, vector<64x512xf32>,
    %c0_8 = arith.constant 0 : index
    %c0_9 = arith.constant 0 : index
    %10 = vector.load %arg3[%c0_8, %c0_9] : memref<128x512xbf16, #tpu.memory_space<vmem>>, vector<128x512xbf16>
    %c0_10 = arith.constant 0 : index
    %c0_11 = arith.constant 0 : index
    %11 = vector.load %arg11[%c0_10, %c0_11] : memref<8x128xf32, #tpu.memory_space<vmem>>, vector<8x128xf32>
    %c0_12 = arith.constant 0 : index
    %c0_13 = arith.constant 0 : index
    %12 = vector.load %arg12[%c0_12, %c0_13] : memref<8x128xf32, #tpu.memory_space<vmem>>, vector<8x128xf32>
    %c0_i32_14 = arith.constant 0 : i32
    %c8_i32 = arith.constant 8 : i32
    %13 = arith.muli %c0_i32_14, %c8_i32 : i32
    %14 = tpu.assume_multiple %13, 8 : i32
    %15 = arith.index_cast %14 : i32 to index
    %c0_15 = arith.constant 0 : index
    %16 = vector.load %arg10[%15, %c0_15] : memref<64x512xf32, #tpu.memory_space<vmem>>, vector<8x512xf32>
    %17 = arith.truncf %11 : vector<8x128xf32> to vector<8x128xbf16>
    %cst_16 = arith.constant dense<0.000000e+00> : vector<8x512xf32>
    %18 = tpu.matmul %17, %10, %cst_16 {dimension_numbers = #tpu.dot_dimension_numbers<[1], [0], [0], [1], [0, 0, 1, 1], [], []>} : vector<8x128xbf16>, vector<128x512xbf16>, vector<8x512xf32> -> vector<8x512xf32>
    %19 = arith.addf %16, %18 : vector<8x512xf32>
    %20 = vector.extract_strided_slice %19 {offsets = [0, 0], sizes = [8, 128], strides = [1, 1]} : vector<8x512xf32> to vector<8x128xf32>
    %21 = arith.negf %20 : vector<8x128xf32>
    %22 = math.exp %21 : vector<8x128xf32>
    %cst_17 = arith.constant 1.000000e+00 : f32
    %23 = vector.broadcast %cst_17 : f32 to vector<8x128xf32>
    %24 = arith.addf %23, %22 : vector<8x128xf32>
    %25 = arith.divf %23, %24 : vector<8x128xf32>
    %26 = vector.extract_strided_slice %19 {offsets = [0, 128], sizes = [8, 128], strides = [1, 1]} : vector<8x512xf32> to vector<8x128xf32>
    %27 = arith.negf %26 : vector<8x128xf32>
    %28 = math.exp %27 : vector<8x128xf32>
    %cst_18 = arith.constant 1.000000e+00 : f32
    %29 = vector.broadcast %cst_18 : f32 to vector<8x128xf32>
    %30 = arith.addf %29, %28 : vector<8x128xf32>
    %31 = arith.divf %29, %30 : vector<8x128xf32>
    %32 = vector.extract_strided_slice %19 {offsets = [0, 256], sizes = [8, 128], strides = [1, 1]} : vector<8x512xf32> to vector<8x128xf32>
    %33 = math.tanh %32 : vector<8x128xf32>
    %34 = vector.extract_strided_slice %19 {offsets = [0, 384], sizes = [8, 128], strides = [1, 1]} : vector<8x512xf32> to vector<8x128xf32>
    %35 = arith.negf %34 : vector<8x128xf32>
    %36 = math.exp %35 : vector<8x128xf32>
    %cst_19 = arith.constant 1.000000e+00 : f32
    %37 = vector.broadcast %cst_19 : f32 to vector<8x128xf32>
    %38 = arith.addf %37, %36 : vector<8x128xf32>
    %39 = arith.divf %37, %38 : vector<8x128xf32>
    %40 = arith.mulf %31, %12 : vector<8x128xf32>
    %41 = arith.mulf %25, %33 : vector<8x128xf32>
    %42 = arith.addf %40, %41 : vector<8x128xf32>
    %43 = math.tanh %42 : vector<8x128xf32>
    %44 = arith.mulf %39, %43 : vector<8x128xf32>
    %45 = arith.index_cast %14 : i32 to index
    %c0_20 = arith.constant 0 : index
    %46 = vector.load %arg7[%45, %c0_20] : memref<64x128xf32, #tpu.memory_space<vmem>>, vector<8x128xf32>
    tpu.vector_store %arg7[%45, %c0_20], %44 {strides = array<i32>} : memref<64x128xf32, #tpu.memory_space<vmem>>, vector<8x128xf32>,
    %c1_i32 = arith.constant 1 : i32
    %c8_i32_21 = arith.constant 8 : i32
    %47 = arith.muli %c1_i32, %c8_i32_21 : i32
    %48 = tpu.assume_multiple %47, 8 : i32
    %49 = arith.index_cast %48 : i32 to index
    %c0_22 = arith.constant 0 : index
    %50 = vector.load %arg10[%49, %c0_22] : memref<64x512xf32, #tpu.memory_space<vmem>>, vector<8x512xf32>
    %51 = arith.truncf %44 : vector<8x128xf32> to vector<8x128xbf16>
    %cst_23 = arith.constant dense<0.000000e+00> : vector<8x512xf32>
    %52 = tpu.matmul %51, %10, %cst_23 {dimension_numbers = #tpu.dot_dimension_numbers<[1], [0], [0], [1], [0, 0, 1, 1], [], []>} : vector<8x128xbf16>, vector<128x512xbf16>, vector<8x512xf32> -> vector<8x512xf32>
    %53 = arith.addf %50, %52 : vector<8x512xf32>
    %54 = vector.extract_strided_slice %53 {offsets = [0, 0], sizes = [8, 128], strides = [1, 1]} : vector<8x512xf32> to vector<8x128xf32>
    %55 = arith.negf %54 : vector<8x128xf32>
    %56 = math.exp %55 : vector<8x128xf32>
    %cst_24 = arith.constant 1.000000e+00 : f32
    %57 = vector.broadcast %cst_24 : f32 to vector<8x128xf32>
    %58 = arith.addf %57, %56 : vector<8x128xf32>
    %59 = arith.divf %57, %58 : vector<8x128xf32>
    %60 = vector.extract_strided_slice %53 {offsets = [0, 128], sizes = [8, 128], strides = [1, 1]} : vector<8x512xf32> to vector<8x128xf32>
    %61 = arith.negf %60 : vector<8x128xf32>
    %62 = math.exp %61 : vector<8x128xf32>
    %cst_25 = arith.constant 1.000000e+00 : f32
    %63 = vector.broadcast %cst_25 : f32 to vector<8x128xf32>
    %64 = arith.addf %63, %62 : vector<8x128xf32>
    %65 = arith.divf %63, %64 : vector<8x128xf32>
    %66 = vector.extract_strided_slice %53 {offsets = [0, 256], sizes = [8, 128], strides = [1, 1]} : vector<8x512xf32> to vector<8x128xf32>
    %67 = math.tanh %66 : vector<8x128xf32>
    %68 = vector.extract_strided_slice %53 {offsets = [0, 384], sizes = [8, 128], strides = [1, 1]} : vector<8x512xf32> to vector<8x128xf32>
    %69 = arith.negf %68 : vector<8x128xf32>
    %70 = math.exp %69 : vector<8x128xf32>
    %cst_26 = arith.constant 1.000000e+00 : f32
    %71 = vector.broadcast %cst_26 : f32 to vector<8x128xf32>
    %72 = arith.addf %71, %70 : vector<8x128xf32>
    %73 = arith.divf %71, %72 : vector<8x128xf32>
    %74 = arith.mulf %65, %42 : vector<8x128xf32>
    %75 = arith.mulf %59, %67 : vector<8x128xf32>
    %76 = arith.addf %74, %75 : vector<8x128xf32>
    %77 = math.tanh %76 : vector<8x128xf32>
    %78 = arith.mulf %73, %77 : vector<8x128xf32>
    %79 = arith.index_cast %48 : i32 to index
    %c0_27 = arith.constant 0 : index
    %80 = vector.load %arg7[%79, %c0_27] : memref<64x128xf32, #tpu.memory_space<vmem>>, vector<8x128xf32>
    tpu.vector_store %arg7[%79, %c0_27], %78 {strides = array<i32>} : memref<64x128xf32, #tpu.memory_space<vmem>>, vector<8x128xf32>,
    %c2_i32 = arith.constant 2 : i32
    %c8_i32_28 = arith.constant 8 : i32
    %81 = arith.muli %c2_i32, %c8_i32_28 : i32
    %82 = tpu.assume_multiple %81, 8 : i32
    %83 = arith.index_cast %82 : i32 to index
    %c0_29 = arith.constant 0 : index
    %84 = vector.load %arg10[%83, %c0_29] : memref<64x512xf32, #tpu.memory_space<vmem>>, vector<8x512xf32>
    %85 = arith.truncf %78 : vector<8x128xf32> to vector<8x128xbf16>
    %cst_30 = arith.constant dense<0.000000e+00> : vector<8x512xf32>
    %86 = tpu.matmul %85, %10, %cst_30 {dimension_numbers = #tpu.dot_dimension_numbers<[1], [0], [0], [1], [0, 0, 1, 1], [], []>} : vector<8x128xbf16>, vector<128x512xbf16>, vector<8x512xf32> -> vector<8x512xf32>
    %87 = arith.addf %84, %86 : vector<8x512xf32>
    %88 = vector.extract_strided_slice %87 {offsets = [0, 0], sizes = [8, 128], strides = [1, 1]} : vector<8x512xf32> to vector<8x128xf32>
    %89 = arith.negf %88 : vector<8x128xf32>
    %90 = math.exp %89 : vector<8x128xf32>
    %cst_31 = arith.constant 1.000000e+00 : f32
    %91 = vector.broadcast %cst_31 : f32 to vector<8x128xf32>
    %92 = arith.addf %91, %90 : vector<8x128xf32>
    %93 = arith.divf %91, %92 : vector<8x128xf32>
    %94 = vector.extract_strided_slice %87 {offsets = [0, 128], sizes = [8, 128], strides = [1, 1]} : vector<8x512xf32> to vector<8x128xf32>
    %95 = arith.negf %94 : vector<8x128xf32>
    %96 = math.exp %95 : vector<8x128xf32>
    %cst_32 = arith.constant 1.000000e+00 : f32
    %97 = vector.broadcast %cst_32 : f32 to vector<8x128xf32>
    %98 = arith.addf %97, %96 : vector<8x128xf32>
    %99 = arith.divf %97, %98 : vector<8x128xf32>
    %100 = vector.extract_strided_slice %87 {offsets = [0, 256], sizes = [8, 128], strides = [1, 1]} : vector<8x512xf32> to vector<8x128xf32>
    %101 = math.tanh %100 : vector<8x128xf32>
    %102 = vector.extract_strided_slice %87 {offsets = [0, 384], sizes = [8, 128], strides = [1, 1]} : vector<8x512xf32> to vector<8x128xf32>
    %103 = arith.negf %102 : vector<8x128xf32>
    %104 = math.exp %103 : vector<8x128xf32>
    %cst_33 = arith.constant 1.000000e+00 : f32
    %105 = vector.broadcast %cst_33 : f32 to vector<8x128xf32>
    %106 = arith.addf %105, %104 : vector<8x128xf32>
    %107 = arith.divf %105, %106 : vector<8x128xf32>
    %108 = arith.mulf %99, %76 : vector<8x128xf32>
    %109 = arith.mulf %93, %101 : vector<8x128xf32>
    %110 = arith.addf %108, %109 : vector<8x128xf32>
    %111 = math.tanh %110 : vector<8x128xf32>
    %112 = arith.mulf %107, %111 : vector<8x128xf32>
    %113 = arith.index_cast %82 : i32 to index
    %c0_34 = arith.constant 0 : index
    %114 = vector.load %arg7[%113, %c0_34] : memref<64x128xf32, #tpu.memory_space<vmem>>, vector<8x128xf32>
    tpu.vector_store %arg7[%113, %c0_34], %112 {strides = array<i32>} : memref<64x128xf32, #tpu.memory_space<vmem>>, vector<8x128xf32>,
    %c3_i32 = arith.constant 3 : i32
    %c8_i32_35 = arith.constant 8 : i32
    %115 = arith.muli %c3_i32, %c8_i32_35 : i32
    %116 = tpu.assume_multiple %115, 8 : i32
    %117 = arith.index_cast %116 : i32 to index
    %c0_36 = arith.constant 0 : index
    %118 = vector.load %arg10[%117, %c0_36] : memref<64x512xf32, #tpu.memory_space<vmem>>, vector<8x512xf32>
    %119 = arith.truncf %112 : vector<8x128xf32> to vector<8x128xbf16>
    %cst_37 = arith.constant dense<0.000000e+00> : vector<8x512xf32>
    %120 = tpu.matmul %119, %10, %cst_37 {dimension_numbers = #tpu.dot_dimension_numbers<[1], [0], [0], [1], [0, 0, 1, 1], [], []>} : vector<8x128xbf16>, vector<128x512xbf16>, vector<8x512xf32> -> vector<8x512xf32>
    %121 = arith.addf %118, %120 : vector<8x512xf32>
    %122 = vector.extract_strided_slice %121 {offsets = [0, 0], sizes = [8, 128], strides = [1, 1]} : vector<8x512xf32> to vector<8x128xf32>
    %123 = arith.negf %122 : vector<8x128xf32>
    %124 = math.exp %123 : vector<8x128xf32>
    %cst_38 = arith.constant 1.000000e+00 : f32
    %125 = vector.broadcast %cst_38 : f32 to vector<8x128xf32>
    %126 = arith.addf %125, %124 : vector<8x128xf32>
    %127 = arith.divf %125, %126 : vector<8x128xf32>
    %128 = vector.extract_strided_slice %121 {offsets = [0, 128], sizes = [8, 128], strides = [1, 1]} : vector<8x512xf32> to vector<8x128xf32>
    %129 = arith.negf %128 : vector<8x128xf32>
    %130 = math.exp %129 : vector<8x128xf32>
    %cst_39 = arith.constant 1.000000e+00 : f32
    %131 = vector.broadcast %cst_39 : f32 to vector<8x128xf32>
    %132 = arith.addf %131, %130 : vector<8x128xf32>
    %133 = arith.divf %131, %132 : vector<8x128xf32>
    %134 = vector.extract_strided_slice %121 {offsets = [0, 256], sizes = [8, 128], strides = [1, 1]} : vector<8x512xf32> to vector<8x128xf32>
    %135 = math.tanh %134 : vector<8x128xf32>
    %136 = vector.extract_strided_slice %121 {offsets = [0, 384], sizes = [8, 128], strides = [1, 1]} : vector<8x512xf32> to vector<8x128xf32>
    %137 = arith.negf %136 : vector<8x128xf32>
    %138 = math.exp %137 : vector<8x128xf32>
    %cst_40 = arith.constant 1.000000e+00 : f32
    %139 = vector.broadcast %cst_40 : f32 to vector<8x128xf32>
    %140 = arith.addf %139, %138 : vector<8x128xf32>
    %141 = arith.divf %139, %140 : vector<8x128xf32>
    %142 = arith.mulf %133, %110 : vector<8x128xf32>
    %143 = arith.mulf %127, %135 : vector<8x128xf32>
    %144 = arith.addf %142, %143 : vector<8x128xf32>
    %145 = math.tanh %144 : vector<8x128xf32>
    %146 = arith.mulf %141, %145 : vector<8x128xf32>
    %147 = arith.index_cast %116 : i32 to index
    %c0_41 = arith.constant 0 : index
    %148 = vector.load %arg7[%147, %c0_41] : memref<64x128xf32, #tpu.memory_space<vmem>>, vector<8x128xf32>
    tpu.vector_store %arg7[%147, %c0_41], %146 {strides = array<i32>} : memref<64x128xf32, #tpu.memory_space<vmem>>, vector<8x128xf32>,
    %c4_i32 = arith.constant 4 : i32
    %c8_i32_42 = arith.constant 8 : i32
    %149 = arith.muli %c4_i32, %c8_i32_42 : i32
    %150 = tpu.assume_multiple %149, 8 : i32
    %151 = arith.index_cast %150 : i32 to index
    %c0_43 = arith.constant 0 : index
    %152 = vector.load %arg10[%151, %c0_43] : memref<64x512xf32, #tpu.memory_space<vmem>>, vector<8x512xf32>
    %153 = arith.truncf %146 : vector<8x128xf32> to vector<8x128xbf16>
    %cst_44 = arith.constant dense<0.000000e+00> : vector<8x512xf32>
    %154 = tpu.matmul %153, %10, %cst_44 {dimension_numbers = #tpu.dot_dimension_numbers<[1], [0], [0], [1], [0, 0, 1, 1], [], []>} : vector<8x128xbf16>, vector<128x512xbf16>, vector<8x512xf32> -> vector<8x512xf32>
    %155 = arith.addf %152, %154 : vector<8x512xf32>
    %156 = vector.extract_strided_slice %155 {offsets = [0, 0], sizes = [8, 128], strides = [1, 1]} : vector<8x512xf32> to vector<8x128xf32>
    %157 = arith.negf %156 : vector<8x128xf32>
    %158 = math.exp %157 : vector<8x128xf32>
    %cst_45 = arith.constant 1.000000e+00 : f32
    %159 = vector.broadcast %cst_45 : f32 to vector<8x128xf32>
    %160 = arith.addf %159, %158 : vector<8x128xf32>
    %161 = arith.divf %159, %160 : vector<8x128xf32>
    %162 = vector.extract_strided_slice %155 {offsets = [0, 128], sizes = [8, 128], strides = [1, 1]} : vector<8x512xf32> to vector<8x128xf32>
    %163 = arith.negf %162 : vector<8x128xf32>
    %164 = math.exp %163 : vector<8x128xf32>
    %cst_46 = arith.constant 1.000000e+00 : f32
    %165 = vector.broadcast %cst_46 : f32 to vector<8x128xf32>
    %166 = arith.addf %165, %164 : vector<8x128xf32>
    %167 = arith.divf %165, %166 : vector<8x128xf32>
    %168 = vector.extract_strided_slice %155 {offsets = [0, 256], sizes = [8, 128], strides = [1, 1]} : vector<8x512xf32> to vector<8x128xf32>
    %169 = math.tanh %168 : vector<8x128xf32>
    %170 = vector.extract_strided_slice %155 {offsets = [0, 384], sizes = [8, 128], strides = [1, 1]} : vector<8x512xf32> to vector<8x128xf32>
    %171 = arith.negf %170 : vector<8x128xf32>
    %172 = math.exp %171 : vector<8x128xf32>
    %cst_47 = arith.constant 1.000000e+00 : f32
    %173 = vector.broadcast %cst_47 : f32 to vector<8x128xf32>
    %174 = arith.addf %173, %172 : vector<8x128xf32>
    %175 = arith.divf %173, %174 : vector<8x128xf32>
    %176 = arith.mulf %167, %144 : vector<8x128xf32>
    %177 = arith.mulf %161, %169 : vector<8x128xf32>
    %178 = arith.addf %176, %177 : vector<8x128xf32>
    %179 = math.tanh %178 : vector<8x128xf32>
    %180 = arith.mulf %175, %179 : vector<8x128xf32>
    %181 = arith.index_cast %150 : i32 to index
    %c0_48 = arith.constant 0 : index
    %182 = vector.load %arg7[%181, %c0_48] : memref<64x128xf32, #tpu.memory_space<vmem>>, vector<8x128xf32>
    tpu.vector_store %arg7[%181, %c0_48], %180 {strides = array<i32>} : memref<64x128xf32, #tpu.memory_space<vmem>>, vector<8x128xf32>,
    %c5_i32 = arith.constant 5 : i32
    %c8_i32_49 = arith.constant 8 : i32
    %183 = arith.muli %c5_i32, %c8_i32_49 : i32
    %184 = tpu.assume_multiple %183, 8 : i32
    %185 = arith.index_cast %184 : i32 to index
    %c0_50 = arith.constant 0 : index
    %186 = vector.load %arg10[%185, %c0_50] : memref<64x512xf32, #tpu.memory_space<vmem>>, vector<8x512xf32>
    %187 = arith.truncf %180 : vector<8x128xf32> to vector<8x128xbf16>
    %cst_51 = arith.constant dense<0.000000e+00> : vector<8x512xf32>
    %188 = tpu.matmul %187, %10, %cst_51 {dimension_numbers = #tpu.dot_dimension_numbers<[1], [0], [0], [1], [0, 0, 1, 1], [], []>} : vector<8x128xbf16>, vector<128x512xbf16>, vector<8x512xf32> -> vector<8x512xf32>
    %189 = arith.addf %186, %188 : vector<8x512xf32>
    %190 = vector.extract_strided_slice %189 {offsets = [0, 0], sizes = [8, 128], strides = [1, 1]} : vector<8x512xf32> to vector<8x128xf32>
    %191 = arith.negf %190 : vector<8x128xf32>
    %192 = math.exp %191 : vector<8x128xf32>
    %cst_52 = arith.constant 1.000000e+00 : f32
    %193 = vector.broadcast %cst_52 : f32 to vector<8x128xf32>
    %194 = arith.addf %193, %192 : vector<8x128xf32>
    %195 = arith.divf %193, %194 : vector<8x128xf32>
    %196 = vector.extract_strided_slice %189 {offsets = [0, 128], sizes = [8, 128], strides = [1, 1]} : vector<8x512xf32> to vector<8x128xf32>
    %197 = arith.negf %196 : vector<8x128xf32>
    %198 = math.exp %197 : vector<8x128xf32>
    %cst_53 = arith.constant 1.000000e+00 : f32
    %199 = vector.broadcast %cst_53 : f32 to vector<8x128xf32>
    %200 = arith.addf %199, %198 : vector<8x128xf32>
    %201 = arith.divf %199, %200 : vector<8x128xf32>
    %202 = vector.extract_strided_slice %189 {offsets = [0, 256], sizes = [8, 128], strides = [1, 1]} : vector<8x512xf32> to vector<8x128xf32>
    %203 = math.tanh %202 : vector<8x128xf32>
    %204 = vector.extract_strided_slice %189 {offsets = [0, 384], sizes = [8, 128], strides = [1, 1]} : vector<8x512xf32> to vector<8x128xf32>
    %205 = arith.negf %204 : vector<8x128xf32>
    %206 = math.exp %205 : vector<8x128xf32>
    %cst_54 = arith.constant 1.000000e+00 : f32
    %207 = vector.broadcast %cst_54 : f32 to vector<8x128xf32>
    %208 = arith.addf %207, %206 : vector<8x128xf32>
    %209 = arith.divf %207, %208 : vector<8x128xf32>
    %210 = arith.mulf %201, %178 : vector<8x128xf32>
    %211 = arith.mulf %195, %203 : vector<8x128xf32>
    %212 = arith.addf %210, %211 : vector<8x128xf32>
    %213 = math.tanh %212 : vector<8x128xf32>
    %214 = arith.mulf %209, %213 : vector<8x128xf32>
    %215 = arith.index_cast %184 : i32 to index
    %c0_55 = arith.constant 0 : index
    %216 = vector.load %arg7[%215, %c0_55] : memref<64x128xf32, #tpu.memory_space<vmem>>, vector<8x128xf32>
    tpu.vector_store %arg7[%215, %c0_55], %214 {strides = array<i32>} : memref<64x128xf32, #tpu.memory_space<vmem>>, vector<8x128xf32>,
    %c6_i32 = arith.constant 6 : i32
    %c8_i32_56 = arith.constant 8 : i32
    %217 = arith.muli %c6_i32, %c8_i32_56 : i32
    %218 = tpu.assume_multiple %217, 8 : i32
    %219 = arith.index_cast %218 : i32 to index
    %c0_57 = arith.constant 0 : index
    %220 = vector.load %arg10[%219, %c0_57] : memref<64x512xf32, #tpu.memory_space<vmem>>, vector<8x512xf32>
    %221 = arith.truncf %214 : vector<8x128xf32> to vector<8x128xbf16>
    %cst_58 = arith.constant dense<0.000000e+00> : vector<8x512xf32>
    %222 = tpu.matmul %221, %10, %cst_58 {dimension_numbers = #tpu.dot_dimension_numbers<[1], [0], [0], [1], [0, 0, 1, 1], [], []>} : vector<8x128xbf16>, vector<128x512xbf16>, vector<8x512xf32> -> vector<8x512xf32>
    %223 = arith.addf %220, %222 : vector<8x512xf32>
    %224 = vector.extract_strided_slice %223 {offsets = [0, 0], sizes = [8, 128], strides = [1, 1]} : vector<8x512xf32> to vector<8x128xf32>
    %225 = arith.negf %224 : vector<8x128xf32>
    %226 = math.exp %225 : vector<8x128xf32>
    %cst_59 = arith.constant 1.000000e+00 : f32
    %227 = vector.broadcast %cst_59 : f32 to vector<8x128xf32>
    %228 = arith.addf %227, %226 : vector<8x128xf32>
    %229 = arith.divf %227, %228 : vector<8x128xf32>
    %230 = vector.extract_strided_slice %223 {offsets = [0, 128], sizes = [8, 128], strides = [1, 1]} : vector<8x512xf32> to vector<8x128xf32>
    %231 = arith.negf %230 : vector<8x128xf32>
    %232 = math.exp %231 : vector<8x128xf32>
    %cst_60 = arith.constant 1.000000e+00 : f32
    %233 = vector.broadcast %cst_60 : f32 to vector<8x128xf32>
    %234 = arith.addf %233, %232 : vector<8x128xf32>
    %235 = arith.divf %233, %234 : vector<8x128xf32>
    %236 = vector.extract_strided_slice %223 {offsets = [0, 256], sizes = [8, 128], strides = [1, 1]} : vector<8x512xf32> to vector<8x128xf32>
    %237 = math.tanh %236 : vector<8x128xf32>
    %238 = vector.extract_strided_slice %223 {offsets = [0, 384], sizes = [8, 128], strides = [1, 1]} : vector<8x512xf32> to vector<8x128xf32>
    %239 = arith.negf %238 : vector<8x128xf32>
    %240 = math.exp %239 : vector<8x128xf32>
    %cst_61 = arith.constant 1.000000e+00 : f32
    %241 = vector.broadcast %cst_61 : f32 to vector<8x128xf32>
    %242 = arith.addf %241, %240 : vector<8x128xf32>
    %243 = arith.divf %241, %242 : vector<8x128xf32>
    %244 = arith.mulf %235, %212 : vector<8x128xf32>
    %245 = arith.mulf %229, %237 : vector<8x128xf32>
    %246 = arith.addf %244, %245 : vector<8x128xf32>
    %247 = math.tanh %246 : vector<8x128xf32>
    %248 = arith.mulf %243, %247 : vector<8x128xf32>
    %249 = arith.index_cast %218 : i32 to index
    %c0_62 = arith.constant 0 : index
    %250 = vector.load %arg7[%249, %c0_62] : memref<64x128xf32, #tpu.memory_space<vmem>>, vector<8x128xf32>
    tpu.vector_store %arg7[%249, %c0_62], %248 {strides = array<i32>} : memref<64x128xf32, #tpu.memory_space<vmem>>, vector<8x128xf32>,
    %c7_i32 = arith.constant 7 : i32
    %c8_i32_63 = arith.constant 8 : i32
    %251 = arith.muli %c7_i32, %c8_i32_63 : i32
    %252 = tpu.assume_multiple %251, 8 : i32
    %253 = arith.index_cast %252 : i32 to index
    %c0_64 = arith.constant 0 : index
    %254 = vector.load %arg10[%253, %c0_64] : memref<64x512xf32, #tpu.memory_space<vmem>>, vector<8x512xf32>
    %255 = arith.truncf %248 : vector<8x128xf32> to vector<8x128xbf16>
    %cst_65 = arith.constant dense<0.000000e+00> : vector<8x512xf32>
    %256 = tpu.matmul %255, %10, %cst_65 {dimension_numbers = #tpu.dot_dimension_numbers<[1], [0], [0], [1], [0, 0, 1, 1], [], []>} : vector<8x128xbf16>, vector<128x512xbf16>, vector<8x512xf32> -> vector<8x512xf32>
    %257 = arith.addf %254, %256 : vector<8x512xf32>
    %258 = vector.extract_strided_slice %257 {offsets = [0, 0], sizes = [8, 128], strides = [1, 1]} : vector<8x512xf32> to vector<8x128xf32>
    %259 = arith.negf %258 : vector<8x128xf32>
    %260 = math.exp %259 : vector<8x128xf32>
    %cst_66 = arith.constant 1.000000e+00 : f32
    %261 = vector.broadcast %cst_66 : f32 to vector<8x128xf32>
    %262 = arith.addf %261, %260 : vector<8x128xf32>
    %263 = arith.divf %261, %262 : vector<8x128xf32>
    %264 = vector.extract_strided_slice %257 {offsets = [0, 128], sizes = [8, 128], strides = [1, 1]} : vector<8x512xf32> to vector<8x128xf32>
    %265 = arith.negf %264 : vector<8x128xf32>
    %266 = math.exp %265 : vector<8x128xf32>
    %cst_67 = arith.constant 1.000000e+00 : f32
    %267 = vector.broadcast %cst_67 : f32 to vector<8x128xf32>
    %268 = arith.addf %267, %266 : vector<8x128xf32>
    %269 = arith.divf %267, %268 : vector<8x128xf32>
    %270 = vector.extract_strided_slice %257 {offsets = [0, 256], sizes = [8, 128], strides = [1, 1]} : vector<8x512xf32> to vector<8x128xf32>
    %271 = math.tanh %270 : vector<8x128xf32>
    %272 = vector.extract_strided_slice %257 {offsets = [0, 384], sizes = [8, 128], strides = [1, 1]} : vector<8x512xf32> to vector<8x128xf32>
    %273 = arith.negf %272 : vector<8x128xf32>
    %274 = math.exp %273 : vector<8x128xf32>
    %cst_68 = arith.constant 1.000000e+00 : f32
    %275 = vector.broadcast %cst_68 : f32 to vector<8x128xf32>
    %276 = arith.addf %275, %274 : vector<8x128xf32>
    %277 = arith.divf %275, %276 : vector<8x128xf32>
    %278 = arith.mulf %269, %246 : vector<8x128xf32>
    %279 = arith.mulf %263, %271 : vector<8x128xf32>
    %280 = arith.addf %278, %279 : vector<8x128xf32>
    %281 = math.tanh %280 : vector<8x128xf32>
    %282 = arith.mulf %277, %281 : vector<8x128xf32>
    %283 = arith.index_cast %252 : i32 to index
    %c0_69 = arith.constant 0 : index
    %284 = vector.load %arg7[%283, %c0_69] : memref<64x128xf32, #tpu.memory_space<vmem>>, vector<8x128xf32>
    tpu.vector_store %arg7[%283, %c0_69], %282 {strides = array<i32>} : memref<64x128xf32, #tpu.memory_space<vmem>>, vector<8x128xf32>,
    %c8_i32_70 = arith.constant 8 : i32
    %c0_71 = arith.constant 0 : index
    %c0_72 = arith.constant 0 : index
    %285 = vector.load %arg11[%c0_71, %c0_72] : memref<8x128xf32, #tpu.memory_space<vmem>>, vector<8x128xf32>
    tpu.vector_store %arg11[%c0_71, %c0_72], %282 {strides = array<i32>} : memref<8x128xf32, #tpu.memory_space<vmem>>, vector<8x128xf32>,
    %c0_73 = arith.constant 0 : index
    %c0_74 = arith.constant 0 : index
    %286 = vector.load %arg12[%c0_73, %c0_74] : memref<8x128xf32, #tpu.memory_space<vmem>>, vector<8x128xf32>
    tpu.vector_store %arg12[%c0_73, %c0_74], %280 {strides = array<i32>} : memref<8x128xf32, #tpu.memory_space<vmem>>, vector<8x128xf32>,
    %c0_75 = arith.constant 0 : index
    %c0_76 = arith.constant 0 : index
    %287 = vector.load %arg8[%c0_75, %c0_76] : memref<8x128xf32, #tpu.memory_space<vmem>>, vector<8x128xf32>
    tpu.vector_store %arg8[%c0_75, %c0_76], %282 {strides = array<i32>} : memref<8x128xf32, #tpu.memory_space<vmem>>, vector<8x128xf32>,
    %c0_77 = arith.constant 0 : index
    %c0_78 = arith.constant 0 : index
    %288 = vector.load %arg9[%c0_77, %c0_78] : memref<8x128xf32, #tpu.memory_space<vmem>>, vector<8x128xf32>
    tpu.vector_store %arg9[%c0_77, %c0_78], %280 {strides = array<i32>} : memref<8x128xf32, #tpu.memory_space<vmem>>, vector<8x128xf32>,
    return
  }
  func.func @transform_0(%arg0: i32) -> (i32, i32) {
    %c0_i32 = arith.constant 0 : i32
    %c0_i32_0 = arith.constant 0 : i32
    return %arg0, %c0_i32 : i32, i32
  }
  func.func @transform_1(%arg0: i32) -> (i32, i32) {
    %c0_i32 = arith.constant 0 : i32
    %c0_i32_0 = arith.constant 0 : i32
    %c0_i32_1 = arith.constant 0 : i32
    return %c0_i32, %c0_i32_0 : i32, i32
  }
  func.func @transform_2(%arg0: i32) -> (i32, i32) {
    %c0_i32 = arith.constant 0 : i32
    %c0_i32_0 = arith.constant 0 : i32
    %c0_i32_1 = arith.constant 0 : i32
    return %c0_i32, %c0_i32_0 : i32, i32
  }
  func.func @transform_3(%arg0: i32) -> (i32, i32) {
    %c0_i32 = arith.constant 0 : i32
    %c0_i32_0 = arith.constant 0 : i32
    %c0_i32_1 = arith.constant 0 : i32
    return %c0_i32, %c0_i32_0 : i32, i32
  }
  func.func @transform_4(%arg0: i32) -> (i32, i32) {
    %c0_i32 = arith.constant 0 : i32
    %c0_i32_0 = arith.constant 0 : i32
    %c0_i32_1 = arith.constant 0 : i32
    return %c0_i32, %c0_i32_0 : i32, i32
  }
  func.func @transform_5(%arg0: i32) -> (i32, i32) {
    %c0_i32 = arith.constant 0 : i32
    %c0_i32_0 = arith.constant 0 : i32
    %c0_i32_1 = arith.constant 0 : i32
    return %c0_i32, %c0_i32_0 : i32, i32
  }
  func.func @transform_6(%arg0: i32) -> (i32, i32) {
    %c0_i32 = arith.constant 0 : i32
    %c0_i32_0 = arith.constant 0 : i32
    return %arg0, %c0_i32 : i32, i32
  }
  func.func @transform_7(%arg0: i32) -> (i32, i32) {
    %c0_i32 = arith.constant 0 : i32
    %c0_i32_0 = arith.constant 0 : i32
    %c0_i32_1 = arith.constant 0 : i32
    return %c0_i32, %c0_i32_0 : i32, i32
  }
  func.func @transform_8(%arg0: i32) -> (i32, i32) {
    %c0_i32 = arith.constant 0 : i32
    %c0_i32_0 = arith.constant 0 : i32
    %c0_i32_1 = arith.constant 0 : i32
    return %c0_i32, %c0_i32_0 : i32, i32
  }
}

</mosaic_0001>

<llo_original>
// kernel: rnn_forward.3
$region0: #{rnn_forward.3}
  #allocation0 [shape = 'u32[]', space=smem, size = 0x4, offset = 0x4, fixed_abs, tag = 'smem constant byte address 0x4 - core index']
  #allocation1 [shape = 'u32[144,128]{1,0:T(1,128)}', space=vmem, size = 0x12000, scoped, tag = 'internal scratch']
  %s0 = inlined_call_operand.vmem [shape: bf16[16,128], index: 0, kind: input, shape index: {}]
  %s1 = inlined_call_operand.vmem [shape: bf16[128,128], index: 1, kind: input, shape index: {}]
  %s2 = inlined_call_operand.vmem [shape: f32[1,128], index: 2, kind: input, shape index: {}]
  %s3 = inlined_call_operand.hbm [shape: f32[16,128], index: 3, kind: output, shape index: {}]
  %s4 = sld [smem:[#allocation0]]
  $region22: #{rnn_forward.3} parent=0
    _
  %s6 = ssub.s32 1, %s4
  %s7 = scalar_select 0, %s6, %s4
  $region1: #{rnn_forward.3} parent=0
    #allocation2 [shape = 'u8[8192]{0}', space=vmem, size = 0x2000, scoped, tag = 'output window, operand 0, single buffered']
    #allocation3 [shape = 's32[1]{0}', space=sflag, size = 0x4, scoped, tag = 'scoped memory for rnn_forward.3']
    %8 = vsyncpa [#allocation3], 0
    // Predicated region
    $region2: #{rnn_forward.3} parent=1 // pred_check
      _
    $region3: #{rnn_forward.3} parent=1 // pred_check_branch
      %10 = sbr.rel (0) target = $region5
    $region4: #{rnn_forward.3} parent=1 // pred_region
      _
    $region5: #{rnn_forward.3} parent=1 // pred_fallthru
      _
    // Predicated region
    $region6: #{rnn_forward.3} parent=1 // pred_check
      _
    $region7: #{rnn_forward.3} parent=1 // pred_check_branch
      %12 = sbr.rel (0) target = $region9
    $region8: #{rnn_forward.3} parent=1 // pred_region
      _
    $region9: #{rnn_forward.3} parent=1 // pred_fallthru
      _
    // Predicated region
    $region10: #{rnn_forward.3} parent=1 // pred_check
      _
    $region11: #{rnn_forward.3} parent=1 // pred_check_branch
      %14 = sbr.rel (0) target = $region13
    $region12: #{rnn_forward.3} parent=1 // pred_region
      _
    $region13: #{rnn_forward.3} parent=1 // pred_fallthru
      _
    %v16 = vld [vmem:[%s0] sm:$0xf]
    %v17 = vld [vmem:[%s0 + $0x4] sm:$0xf]
    %v18 = vld [vmem:[%s1] sm:$0xf]
    %v19 = vld [vmem:[%s1 + $0x4] sm:$0xf]
    %v20 = vld [vmem:[%s1 + $0x8] sm:$0xf]
    %v21 = vld [vmem:[%s1 + $0xc] sm:$0xf]
    %v22 = vld [vmem:[%s1 + $0x10] sm:$0xf]
    %v23 = vld [vmem:[%s1 + $0x14] sm:$0xf]
    %v24 = vld [vmem:[%s1 + $0x18] sm:$0xf]
    %v25 = vld [vmem:[%s1 + $0x1c] sm:$0xf]
    %v26 = vld [vmem:[%s1 + $0x20] sm:$0xf]
    %v27 = vld [vmem:[%s1 + $0x24] sm:$0xf]
    %v28 = vld [vmem:[%s1 + $0x28] sm:$0xf]
    %v29 = vld [vmem:[%s1 + $0x2c] sm:$0xf]
    %v30 = vld [vmem:[%s1 + $0x30] sm:$0xf]
    %v31 = vld [vmem:[%s1 + $0x34] sm:$0xf]
    %v32 = vld [vmem:[%s1 + $0x38] sm:$0xf]
    %v33 = vld [vmem:[%s1 + $0x3c] sm:$0xf]
    %v34 = vld [vmem:[%s2] sm:$0x1]
    %v36 = vlaneseq
    %v37 = vshrl.u32 %v36, 7
    %v38 = vsub.s32 0, %v37
    %v39 = vrot.slane %v34, %v38
    %v43 = vunpack.c.l.b16 %v16
    %v44 = vunpack.c.l.b16 %v17
    %v45 = vpack.c.b16 %v44, %v43
    %v63 = vunpack.c.l.b16 %v18
    %v64 = vunpack.c.l.b16 %v19
    %v65 = vunpack.c.l.b16 %v20
    %v66 = vunpack.c.l.b16 %v21
    %v67 = vunpack.c.l.b16 %v22
    %v68 = vunpack.c.l.b16 %v23
    %v69 = vunpack.c.l.b16 %v24
    %v70 = vunpack.c.l.b16 %v25
    %v71 = vunpack.c.l.b16 %v26
    %v72 = vunpack.c.l.b16 %v27
    %v73 = vunpack.c.l.b16 %v28
    %v74 = vunpack.c.l.b16 %v29
    %v75 = vunpack.c.l.b16 %v30
    %v76 = vunpack.c.l.b16 %v31
    %v77 = vunpack.c.l.b16 %v32
    %v78 = vunpack.c.l.b16 %v33
    %v79 = vpack.c.b16 %v64, %v63
    %v80 = vpack.c.b16 %v66, %v65
    %v81 = vpack.c.b16 %v68, %v67
    %v82 = vpack.c.b16 %v70, %v69
    %v83 = vpack.c.b16 %v72, %v71
    %v84 = vpack.c.b16 %v74, %v73
    %v85 = vpack.c.b16 %v76, %v75
    %v86 = vpack.c.b16 %v78, %v77
    %95 = vmatprep.subr.bf16.mxu0 0
    %96 = vmatpush1.bf16.msra.mxu0 %v79
    %97 = vmatprep.subr.bf16.mxu0 0
    %98 = vmatpush1.bf16.msra.mxu0 %v80
    %99 = vmatprep.subr.bf16.mxu0 0
    %100 = vmatpush1.bf16.msra.mxu0 %v81
    %101 = vmatprep.subr.bf16.mxu0 0
    %102 = vmatpush1.bf16.msra.mxu0 %v82
    %103 = vmatprep.subr.bf16.mxu0 0
    %104 = vmatpush1.bf16.msra.mxu0 %v83
    %105 = vmatprep.subr.bf16.mxu0 0
    %106 = vmatpush1.bf16.msra.mxu0 %v84
    %107 = vmatprep.subr.bf16.mxu0 0
    %108 = vmatpush1.bf16.msra.mxu0 %v85
    %109 = vmatprep.subr.bf16.mxu0 0
    %110 = vmatpush1.bf16.msra.mxu0 %v86
    %111 = vmatprep.subr.bf16.mxu0 0
    %112 = vmatpush1.bf16.msra.mxu0 0
    %113 = vmatprep.subr.bf16.mxu0 0
    %114 = vmatpush1.bf16.msra.mxu0 0
    %115 = vmatprep.subr.bf16.mxu0 0
    %116 = vmatpush1.bf16.msra.mxu0 0
    %117 = vmatprep.subr.bf16.mxu0 0
    %118 = vmatpush1.bf16.msra.mxu0 0
    %119 = vmatprep.subr.bf16.mxu0 0
    %120 = vmatpush1.bf16.msra.mxu0 0
    %121 = vmatprep.subr.bf16.mxu0 0
    %122 = vmatpush1.bf16.msra.mxu0 0
    %123 = vmatprep.subr.bf16.mxu0 0
    %124 = vmatpush1.bf16.msra.mxu0 0
    %125 = vmatprep.subr.bf16.mxu0 0
    %126 = vmatpush1.bf16.msra.mxu0 0
    %127 = vmatprep.mubr.bf16.mxu0 0
    %128 = vmatmul.mubr.bf16.gmra.mrb[0].mxu0 %v45
    %v129 = vpop.f32.mrb[0].mxu0
    %v130 = vadd.f32 %v39, %v129
    %v131 = vpop.f32.mrb[0].mxu0
    %v132 = vpop.f32.mrb[0].mxu0
    %v133 = vadd.f32 %v39, %v132
    %v134 = vpop.f32.mrb[0].mxu0
    %135 = vdwg.mxu0
    %136 = vst [vmem:[#allocation2] sm:$0xff] %v130
    %137 = vst [vmem:[#allocation2 + $0x8] sm:$0xff] %v133
    // Predicated region
    $region14: #{rnn_forward.3} parent=1 // pred_check
      _
    $region15: #{rnn_forward.3} parent=1 // pred_check_branch
      %139 = sbr.rel (0) target = $region17
    $region16: #{rnn_forward.3} parent=1 // pred_region
      %s141 = ssub.s32 256, 256
      %142 = vsyncadd [#allocation3], %s141
      %s143 = sshll.u32 [#allocation2], 4
      %s144 = int_to_ptr.vmem [resolvable:$true] %s143
      %149 = dma.vmem_to_hbm [thread:$0]  %s144, 256, %s3, [#allocation3], 128, 128, 8
    $region17: #{rnn_forward.3} parent=1 // pred_fallthru
      _
    // Predicated region
    $region18: #{rnn_forward.3} parent=1 // pred_check
      _
    $region19: #{rnn_forward.3} parent=1 // pred_check_branch
      %151 = sbr.rel (0) target = $region21
    $region20: #{rnn_forward.3} parent=1 // pred_region
      %152 = dma.done [#allocation3], 256
    $region21: #{rnn_forward.3} parent=1 // pred_fallthru
      _
    %153 = vsyncpa [#allocation3], 1

// kernel: rnn_forward.2
$region0: #{rnn_forward.2}
  #allocation0 [shape = 'u32[]', space=smem, size = 0x4, offset = 0x4, fixed_abs, tag = 'smem constant byte address 0x4 - core index']
  #allocation1 [shape = 'u32[144,128]{1,0:T(1,128)}', space=vmem, size = 0x12000, scoped, tag = 'internal scratch']
  #allocation2 [shape = 'f32[64,512]{1,0:T(8,128)}', space=vmem, size = 0x20000, scoped, tag = 'scratch operand']
  #allocation3 [shape = 'f32[8,128]{1,0:T(8,128)}', space=vmem, size = 0x1000, scoped, tag = 'scratch operand']
  #allocation4 [shape = 'f32[8,128]{1,0:T(8,128)}', space=vmem, size = 0x1000, scoped, tag = 'scratch operand']
  %s0 = inlined_call_operand.vmem [shape: bf16[64,16], index: 0, kind: input, shape index: {}]
  %s1 = inlined_call_operand.vmem [shape: bf16[16,512], index: 1, kind: input, shape index: {}]
  %s2 = inlined_call_operand.vmem [shape: bf16[128,512], index: 2, kind: input, shape index: {}]
  %s3 = inlined_call_operand.vmem [shape: f32[1,512], index: 3, kind: input, shape index: {}]
  %s4 = inlined_call_operand.vmem [shape: f32[8,128], index: 4, kind: input, shape index: {}]
  %s5 = inlined_call_operand.vmem [shape: f32[8,128], index: 5, kind: input, shape index: {}]
  %s6 = inlined_call_operand.vmem [shape: f32[64,128], index: 6, kind: output, shape index: {0}]
  %s7 = inlined_call_operand.vmem [shape: f32[8,128], index: 7, kind: output, shape index: {1}]
  %s8 = inlined_call_operand.vmem [shape: f32[8,128], index: 8, kind: output, shape index: {2}]
  %9 = xla_tuple %s6, %s7, %s8
  %s10 = sld [smem:[#allocation0]]
  $region54: #{rnn_forward.2} parent=0
    _
  %s12 = ssub.s32 1, %s10
  %s13 = scalar_select 0, %s12, %s10
  // Predicated region
  $region2: #{rnn_forward.2} parent=0 // pred_check
    _
  $region3: #{rnn_forward.2} parent=0 // pred_check_branch
    %15 = sbr.rel (0) target = $region5
  $region4: #{rnn_forward.2} parent=0 // pred_region
    _
  $region5: #{rnn_forward.2} parent=0 // pred_fallthru
    _
  // Predicated region
  $region6: #{rnn_forward.2} parent=0 // pred_check
    _
  $region7: #{rnn_forward.2} parent=0 // pred_check_branch
    %17 = sbr.rel (0) target = $region9
  $region8: #{rnn_forward.2} parent=0 // pred_region
    _
  $region9: #{rnn_forward.2} parent=0 // pred_fallthru
    _
  // Predicated region
  $region10: #{rnn_forward.2} parent=0 // pred_check
    _
  $region11: #{rnn_forward.2} parent=0 // pred_check_branch
    %19 = sbr.rel (0) target = $region13
  $region12: #{rnn_forward.2} parent=0 // pred_region
    _
  $region13: #{rnn_forward.2} parent=0 // pred_fallthru
    _
  // Predicated region
  $region14: #{rnn_forward.2} parent=0 // pred_check
    _
  $region15: #{rnn_forward.2} parent=0 // pred_check_branch
    %21 = sbr.rel (0) target = $region17
  $region16: #{rnn_forward.2} parent=0 // pred_region
    _
  $region17: #{rnn_forward.2} parent=0 // pred_fallthru
    _
  // Predicated region
  $region18: #{rnn_forward.2} parent=0 // pred_check
    _
  $region19: #{rnn_forward.2} parent=0 // pred_check_branch
    %23 = sbr.rel (0) target = $region21
  $region20: #{rnn_forward.2} parent=0 // pred_region
    _
  $region21: #{rnn_forward.2} parent=0 // pred_fallthru
    _
  // Predicated region
  $region22: #{rnn_forward.2} parent=0 // pred_check
    _
  $region23: #{rnn_forward.2} parent=0 // pred_check_branch
    %25 = sbr.rel (0) target = $region25
  $region24: #{rnn_forward.2} parent=0 // pred_region
    _
  $region25: #{rnn_forward.2} parent=0 // pred_fallthru
    _
  %p27 = scmp.eq.s32.totalorder 0, 0
  // Predicated region
  $region26: #{rnn_forward.2} parent=0 // pred_check
    %p28 = pneg %p27
  $region27: #{rnn_forward.2} parent=0 // pred_check_branch
    %30 = sbr.rel (%p28) target = $region29
  $region28: #{rnn_forward.2} parent=0 // pred_region
    %v31 = vld [vmem:[%s4] sm:$0xff]
    %32 = vst [vmem:[#allocation3] sm:$0xff] %v31
    %v33 = vld [vmem:[%s5] sm:$0xff]
    %34 = vst [vmem:[#allocation4] sm:$0xff] %v33
  $region29: #{rnn_forward.2} parent=0 // pred_fallthru
    _
  %v35 = vld [vmem:[%s0] sm:$0xf]
  %v36 = vld [vmem:[%s0 + $0x4] sm:$0xf]
  %v37 = vld [vmem:[%s0 + $0x8] sm:$0xf]
  %v38 = vld [vmem:[%s0 + $0xc] sm:$0xf]
  %v39 = vld [vmem:[%s0 + $0x10] sm:$0xf]
  %v40 = vld [vmem:[%s0 + $0x14] sm:$0xf]
  %v41 = vld [vmem:[%s0 + $0x18] sm:$0xf]
  %v42 = vld [vmem:[%s0 + $0x1c] sm:$0xf]
  %v43 = vld [vmem:[%s1] sm:$0xff]
  %v44 = vld [vmem:[%s1 + $0x8] sm:$0xff]
  %v45 = vld [vmem:[%s1 + $0x10] sm:$0xff]
  %v46 = vld [vmem:[%s1 + $0x18] sm:$0xff]
  %v47 = vld [vmem:[%s3] sm:$0xf]
  %v49 = vlaneseq
  %v50 = vshrl.u32 %v49, 7
  %v51 = vsub.s32 0, %v50
  %v52 = vrot.slane %v47, %v51
  %v53 = vlaneseq
  %v54 = vshrl.u32 %v53, 7
  %v55 = vsub.s32 1, %v54
  %v56 = vrot.slane %v47, %v55
  %v57 = vlaneseq
  %v58 = vshrl.u32 %v57, 7
  %v59 = vsub.s32 2, %v58
  %v60 = vrot.slane %v47, %v59
  %v61 = vlaneseq
  %v62 = vshrl.u32 %v61, 7
  %v63 = vsub.s32 3, %v62
  %v64 = vrot.slane %v47, %v63
  %v77 = vunpack.c.l.b16 %v35
  %v78 = vunpack.c.l.b16 %v36
  %v79 = vunpack.c.l.b16 %v37
  %v80 = vunpack.c.l.b16 %v38
  %v81 = vunpack.c.l.b16 %v39
  %v82 = vunpack.c.l.b16 %v40
  %v83 = vunpack.c.l.b16 %v41
  %v84 = vunpack.c.l.b16 %v42
  %v85 = vpack.c.b16 %v78, %v77
  %v86 = vpack.c.b16 %v80, %v79
  %v87 = vpack.c.b16 %v82, %v81
  %v88 = vpack.c.b16 %v84, %v83
  %v93 = vunpack.c.l.b16 %v43
  %v94 = vunpack.c.h.b16 %v43
  %v95 = vunpack.c.l.b16 %v44
  %v96 = vunpack.c.h.b16 %v44
  %v97 = vunpack.c.l.b16 %v45
  %v98 = vunpack.c.h.b16 %v45
  %v99 = vunpack.c.l.b16 %v46
  %v100 = vunpack.c.h.b16 %v46
  %v101 = vpack.c.b16 %v97, %v93
  %v102 = vpack.c.b16 %v98, %v94
  %v103 = vpack.c.b16 %v99, %v95
  %v104 = vpack.c.b16 %v100, %v96
  %vm109 = vcmask 130048
  %v111 = vsel %vm109, %v85, 0
  %v114 = vsel %vm109, %v86, 0
  %v117 = vsel %vm109, %v87, 0
  %v120 = vsel %vm109, %v88, 0
  %122 = vmatprep.subr.bf16.mxu0 %v102
  %123 = vmatpush1.bf16.msra.mxu0 %v101
  %124 = vmatprep.subr.bf16.mxu0 0
  %125 = vmatpush1.bf16.msra.mxu0 0
  %126 = vmatprep.subr.bf16.mxu0 0
  %127 = vmatpush1.bf16.msra.mxu0 0
  %128 = vmatprep.subr.bf16.mxu0 0
  %129 = vmatpush1.bf16.msra.mxu0 0
  %130 = vmatprep.subr.bf16.mxu0 0
  %131 = vmatpush1.bf16.msra.mxu0 0
  %132 = vmatprep.subr.bf16.mxu0 0
  %133 = vmatpush1.bf16.msra.mxu0 0
  %134 = vmatprep.subr.bf16.mxu0 0
  %135 = vmatpush1.bf16.msra.mxu0 0
  %136 = vmatprep.subr.bf16.mxu0 0
  %137 = vmatpush1.bf16.msra.mxu0 0
  %138 = vmatprep.subr.bf16.mxu0 0
  %139 = vmatpush1.bf16.msra.mxu0 0
  %140 = vmatprep.subr.bf16.mxu0 0
  %141 = vmatpush1.bf16.msra.mxu0 0
  %142 = vmatprep.subr.bf16.mxu0 0
  %143 = vmatpush1.bf16.msra.mxu0 0
  %144 = vmatprep.subr.bf16.mxu0 0
  %145 = vmatpush1.bf16.msra.mxu0 0
  %146 = vmatprep.subr.bf16.mxu0 0
  %147 = vmatpush1.bf16.msra.mxu0 0
  %148 = vmatprep.subr.bf16.mxu0 0
  %149 = vmatpush1.bf16.msra.mxu0 0
  %150 = vmatprep.subr.bf16.mxu0 0
  %151 = vmatpush1.bf16.msra.mxu0 0
  %152 = vmatprep.subr.bf16.mxu0 0
  %153 = vmatpush1.bf16.msra.mxu0 0
  %154 = vmatprep.mubr.bf16.mxu0 0
  %155 = vmatmul.mubr.bf16.gmra.mrb[0].mxu0 %v111
  %v156 = vpop.f32.mrb[0].mxu0
  %v157 = vadd.f32 %v52, %v156
  %v158 = vpop.f32.mrb[0].mxu0
  %v159 = vadd.f32 %v56, %v158
  %v160 = vpop.f32.mrb[0].mxu0
  %v161 = vadd.f32 %v52, %v160
  %v162 = vpop.f32.mrb[0].mxu0
  %v163 = vadd.f32 %v56, %v162
  %164 = vmatprep.mubr.bf16.mxu0 0
  %165 = vmatmul.mubr.bf16.gmra.mrb[0].mxu0 %v114
  %v166 = vpop.f32.mrb[0].mxu0
  %v167 = vadd.f32 %v52, %v166
  %v168 = vpop.f32.mrb[0].mxu0
  %v169 = vadd.f32 %v56, %v168
  %v170 = vpop.f32.mrb[0].mxu0
  %v171 = vadd.f32 %v52, %v170
  %v172 = vpop.f32.mrb[0].mxu0
  %v173 = vadd.f32 %v56, %v172
  %174 = vmatprep.mubr.bf16.mxu0 0
  %175 = vmatmul.mubr.bf16.gmra.mrb[0].mxu0 %v117
  %v176 = vpop.f32.mrb[0].mxu0
  %v177 = vadd.f32 %v52, %v176
  %v178 = vpop.f32.mrb[0].mxu0
  %v179 = vadd.f32 %v56, %v178
  %v180 = vpop.f32.mrb[0].mxu0
  %v181 = vadd.f32 %v52, %v180
  %v182 = vpop.f32.mrb[0].mxu0
  %v183 = vadd.f32 %v56, %v182
  %184 = vmatprep.mubr.bf16.mxu0 0
  %185 = vmatmul.mubr.bf16.gmra.mrb[0].mxu0 %v120
  %v186 = vpop.f32.mrb[0].mxu0
  %v187 = vadd.f32 %v52, %v186
  %v188 = vpop.f32.mrb[0].mxu0
  %v189 = vadd.f32 %v56, %v188
  %v190 = vpop.f32.mrb[0].mxu0
  %v191 = vadd.f32 %v52, %v190
  %v192 = vpop.f32.mrb[0].mxu0
  %v193 = vadd.f32 %v56, %v192
  %194 = vdwg.mxu0
  %195 = vmatprep.subr.bf16.mxu0 %v104
  %196 = vmatpush1.bf16.msra.mxu0 %v103
  %197 = vmatprep.subr.bf16.mxu0 0
  %198 = vmatpush1.bf16.msra.mxu0 0
  %199 = vmatprep.subr.bf16.mxu0 0
  %200 = vmatpush1.bf16.msra.mxu0 0
  %201 = vmatprep.subr.bf16.mxu0 0
  %202 = vmatpush1.bf16.msra.mxu0 0
  %203 = vmatprep.subr.bf16.mxu0 0
  %204 = vmatpush1.bf16.msra.mxu0 0
  %205 = vmatprep.subr.bf16.mxu0 0
  %206 = vmatpush1.bf16.msra.mxu0 0
  %207 = vmatprep.subr.bf16.mxu0 0
  %208 = vmatpush1.bf16.msra.mxu0 0
  %209 = vmatprep.subr.bf16.mxu0 0
  %210 = vmatpush1.bf16.msra.mxu0 0
  %211 = vmatprep.subr.bf16.mxu0 0
  %212 = vmatpush1.bf16.msra.mxu0 0
  %213 = vmatprep.subr.bf16.mxu0 0
  %214 = vmatpush1.bf16.msra.mxu0 0
  %215 = vmatprep.subr.bf16.mxu0 0
  %216 = vmatpush1.bf16.msra.mxu0 0
  %217 = vmatprep.subr.bf16.mxu0 0
  %218 = vmatpush1.bf16.msra.mxu0 0
  %219 = vmatprep.subr.bf16.mxu0 0
  %220 = vmatpush1.bf16.msra.mxu0 0
  %221 = vmatprep.subr.bf16.mxu0 0
  %222 = vmatpush1.bf16.msra.mxu0 0
  %223 = vmatprep.subr.bf16.mxu0 0
  %224 = vmatpush1.bf16.msra.mxu0 0
  %225 = vmatprep.subr.bf16.mxu0 0
  %226 = vmatpush1.bf16.msra.mxu0 0
  %227 = vmatprep.mubr.bf16.mxu0 0
  %228 = vmatmul.mubr.bf16.gmra.mrb[0].mxu0 %v111
  %v229 = vpop.f32.mrb[0].mxu0
  %v230 = vadd.f32 %v60, %v229
  %v231 = vpop.f32.mrb[0].mxu0
  %v232 = vadd.f32 %v64, %v231
  %v233 = vpop.f32.mrb[0].mxu0
  %v234 = vadd.f32 %v60, %v233
  %v235 = vpop.f32.mrb[0].mxu0
  %v236 = vadd.f32 %v64, %v235
  %237 = vmatprep.mubr.bf16.mxu0 0
  %238 = vmatmul.mubr.bf16.gmra.mrb[0].mxu0 %v114
  %v239 = vpop.f32.mrb[0].mxu0
  %v240 = vadd.f32 %v60, %v239
  %v241 = vpop.f32.mrb[0].mxu0
  %v242 = vadd.f32 %v64, %v241
  %v243 = vpop.f32.mrb[0].mxu0
  %v244 = vadd.f32 %v60, %v243
  %v245 = vpop.f32.mrb[0].mxu0
  %v246 = vadd.f32 %v64, %v245
  %247 = vmatprep.mubr.bf16.mxu0 0
  %248 = vmatmul.mubr.bf16.gmra.mrb[0].mxu0 %v117
  %v249 = vpop.f32.mrb[0].mxu0
  %v250 = vadd.f32 %v60, %v249
  %v251 = vpop.f32.mrb[0].mxu0
  %v252 = vadd.f32 %v64, %v251
  %v253 = vpop.f32.mrb[0].mxu0
  %v254 = vadd.f32 %v60, %v253
  %v255 = vpop.f32.mrb[0].mxu0
  %v256 = vadd.f32 %v64, %v255
  %257 = vmatprep.mubr.bf16.mxu0 0
  %258 = vmatmul.mubr.bf16.gmra.mrb[0].mxu0 %v120
  %v259 = vpop.f32.mrb[0].mxu0
  %v260 = vadd.f32 %v60, %v259
  %v261 = vpop.f32.mrb[0].mxu0
  %v262 = vadd.f32 %v64, %v261
  %v263 = vpop.f32.mrb[0].mxu0
  %v264 = vadd.f32 %v60, %v263
  %v265 = vpop.f32.mrb[0].mxu0
  %v266 = vadd.f32 %v64, %v265
  %267 = vdwg.mxu0
  %268 = vst [vmem:[#allocation2] sm:$0xff] %v157
  %269 = vst [vmem:[#allocation2 + $0x8] sm:$0xff] %v159
  %270 = vst [vmem:[#allocation2 + $0x10] sm:$0xff] %v230
  %271 = vst [vmem:[#allocation2 + $0x18] sm:$0xff] %v232
  %272 = vst [vmem:[#allocation2 + $0x20] sm:$0xff] %v161
  %273 = vst [vmem:[#allocation2 + $0x28] sm:$0xff] %v163
  %274 = vst [vmem:[#allocation2 + $0x30] sm:$0xff] %v234
  %275 = vst [vmem:[#allocation2 + $0x38] sm:$0xff] %v236
  %276 = vst [vmem:[#allocation2 + $0x40] sm:$0xff] %v167
  %277 = vst [vmem:[#allocation2 + $0x48] sm:$0xff] %v169
  %278 = vst [vmem:[#allocation2 + $0x50] sm:$0xff] %v240
  %279 = vst [vmem:[#allocation2 + $0x58] sm:$0xff] %v242
  %280 = vst [vmem:[#allocation2 + $0x60] sm:$0xff] %v171
  %281 = vst [vmem:[#allocation2 + $0x68] sm:$0xff] %v173
  %282 = vst [vmem:[#allocation2 + $0x70] sm:$0xff] %v244
  %283 = vst [vmem:[#allocation2 + $0x78] sm:$0xff] %v246
  %284 = vst [vmem:[#allocation2 + $0x80] sm:$0xff] %v177
  %285 = vst [vmem:[#allocation2 + $0x88] sm:$0xff] %v179
  %286 = vst [vmem:[#allocation2 + $0x90] sm:$0xff] %v250
  %287 = vst [vmem:[#allocation2 + $0x98] sm:$0xff] %v252
  %288 = vst [vmem:[#allocation2 + $0xa0] sm:$0xff] %v181
  %289 = vst [vmem:[#allocation2 + $0xa8] sm:$0xff] %v183
  %290 = vst [vmem:[#allocation2 + $0xb0] sm:$0xff] %v254
  %291 = vst [vmem:[#allocation2 + $0xb8] sm:$0xff] %v256
  %292 = vst [vmem:[#allocation2 + $0xc0] sm:$0xff] %v187
  %293 = vst [vmem:[#allocation2 + $0xc8] sm:$0xff] %v189
  %294 = vst [vmem:[#allocation2 + $0xd0] sm:$0xff] %v260
  %295 = vst [vmem:[#allocation2 + $0xd8] sm:$0xff] %v262
  %296 = vst [vmem:[#allocation2 + $0xe0] sm:$0xff] %v191
  %297 = vst [vmem:[#allocation2 + $0xe8] sm:$0xff] %v193
  %298 = vst [vmem:[#allocation2 + $0xf0] sm:$0xff] %v264
  %299 = vst [vmem:[#allocation2 + $0xf8] sm:$0xff] %v266
  %v300 = vld [vmem:[%s2] sm:$0xff]
  %v301 = vld [vmem:[%s2 + $0x8] sm:$0xff]
  %v302 = vld [vmem:[%s2 + $0x10] sm:$0xff]
  %v303 = vld [vmem:[%s2 + $0x18] sm:$0xff]
  %v304 = vld [vmem:[%s2 + $0x20] sm:$0xff]
  %v305 = vld [vmem:[%s2 + $0x28] sm:$0xff]
  %v306 = vld [vmem:[%s2 + $0x30] sm:$0xff]
  %v307 = vld [vmem:[%s2 + $0x38] sm:$0xff]
  %v308 = vld [vmem:[%s2 + $0x40] sm:$0xff]
  %v309 = vld [vmem:[%s2 + $0x48] sm:$0xff]
  %v310 = vld [vmem:[%s2 + $0x50] sm:$0xff]
  %v311 = vld [vmem:[%s2 + $0x58] sm:$0xff]
  %v312 = vld [vmem:[%s2 + $0x60] sm:$0xff]
  %v313 = vld [vmem:[%s2 + $0x68] sm:$0xff]
  %v314 = vld [vmem:[%s2 + $0x70] sm:$0xff]
  %v315 = vld [vmem:[%s2 + $0x78] sm:$0xff]
  %v316 = vld [vmem:[%s2 + $0x80] sm:$0xff]
  %v317 = vld [vmem:[%s2 + $0x88] sm:$0xff]
  %v318 = vld [vmem:[%s2 + $0x90] sm:$0xff]
  %v319 = vld [vmem:[%s2 + $0x98] sm:$0xff]
  %v320 = vld [vmem:[%s2 + $0xa0] sm:$0xff]
  %v321 = vld [vmem:[%s2 + $0xa8] sm:$0xff]
  %v322 = vld [vmem:[%s2 + $0xb0] sm:$0xff]
  %v323 = vld [vmem:[%s2 + $0xb8] sm:$0xff]
  %v324 = vld [vmem:[%s2 + $0xc0] sm:$0xff]
  %v325 = vld [vmem:[%s2 + $0xc8] sm:$0xff]
  %v326 = vld [vmem:[%s2 + $0xd0] sm:$0xff]
  %v327 = vld [vmem:[%s2 + $0xd8] sm:$0xff]
  %v328 = vld [vmem:[%s2 + $0xe0] sm:$0xff]
  %v329 = vld [vmem:[%s2 + $0xe8] sm:$0xff]
  %v330 = vld [vmem:[%s2 + $0xf0] sm:$0xff]
  %v331 = vld [vmem:[%s2 + $0xf8] sm:$0xff]
  %v332 = vld [vmem:[#allocation3] sm:$0xff]
  %v333 = vld [vmem:[#allocation4] sm:$0xff]
  %s334 = smul.u32 0, 4
  %s335 = smul.addr %s334, 8
  %s336 = scalar_lea.vmem [#allocation2], %s335
  %v337 = vld [vmem:[%s336] sm:$0xff]
  %v338 = vld [vmem:[%s336 + $0x8] sm:$0xff]
  %v339 = vld [vmem:[%s336 + $0x10] sm:$0xff]
  %v340 = vld [vmem:[%s336 + $0x18] sm:$0xff]
  %v341 = vpack.c.bf16 %v332, %v332
  %v374 = vunpack.c.l.b16 %v300
  %v375 = vunpack.c.h.b16 %v300
  %v376 = vunpack.c.l.b16 %v301
  %v377 = vunpack.c.h.b16 %v301
  %v378 = vunpack.c.l.b16 %v302
  %v379 = vunpack.c.h.b16 %v302
  %v380 = vunpack.c.l.b16 %v303
  %v381 = vunpack.c.h.b16 %v303
  %v382 = vunpack.c.l.b16 %v304
  %v383 = vunpack.c.h.b16 %v304
  %v384 = vunpack.c.l.b16 %v305
  %v385 = vunpack.c.h.b16 %v305
  %v386 = vunpack.c.l.b16 %v306
  %v387 = vunpack.c.h.b16 %v306
  %v388 = vunpack.c.l.b16 %v307
  %v389 = vunpack.c.h.b16 %v307
  %v390 = vunpack.c.l.b16 %v308
  %v391 = vunpack.c.h.b16 %v308
  %v392 = vunpack.c.l.b16 %v309
  %v393 = vunpack.c.h.b16 %v309
  %v394 = vunpack.c.l.b16 %v310
  %v395 = vunpack.c.h.b16 %v310
  %v396 = vunpack.c.l.b16 %v311
  %v397 = vunpack.c.h.b16 %v311
  %v398 = vunpack.c.l.b16 %v312
  %v399 = vunpack.c.h.b16 %v312
  %v400 = vunpack.c.l.b16 %v313
  %v401 = vunpack.c.h.b16 %v313
  %v402 = vunpack.c.l.b16 %v314
  %v403 = vunpack.c.h.b16 %v314
  %v404 = vunpack.c.l.b16 %v315
  %v405 = vunpack.c.h.b16 %v315
  %v406 = vunpack.c.l.b16 %v316
  %v407 = vunpack.c.h.b16 %v316
  %v408 = vunpack.c.l.b16 %v317
  %v409 = vunpack.c.h.b16 %v317
  %v410 = vunpack.c.l.b16 %v318
  %v411 = vunpack.c.h.b16 %v318
  %v412 = vunpack.c.l.b16 %v319
  %v413 = vunpack.c.h.b16 %v319
  %v414 = vunpack.c.l.b16 %v320
  %v415 = vunpack.c.h.b16 %v320
  %v416 = vunpack.c.l.b16 %v321
  %v417 = vunpack.c.h.b16 %v321
  %v418 = vunpack.c.l.b16 %v322
  %v419 = vunpack.c.h.b16 %v322
  %v420 = vunpack.c.l.b16 %v323
  %v421 = vunpack.c.h.b16 %v323
  %v422 = vunpack.c.l.b16 %v324
  %v423 = vunpack.c.h.b16 %v324
  %v424 = vunpack.c.l.b16 %v325
  %v425 = vunpack.c.h.b16 %v325
  %v426 = vunpack.c.l.b16 %v326
  %v427 = vunpack.c.h.b16 %v326
  %v428 = vunpack.c.l.b16 %v327
  %v429 = vunpack.c.h.b16 %v327
  %v430 = vunpack.c.l.b16 %v328
  %v431 = vunpack.c.h.b16 %v328
  %v432 = vunpack.c.l.b16 %v329
  %v433 = vunpack.c.h.b16 %v329
  %v434 = vunpack.c.l.b16 %v330
  %v435 = vunpack.c.h.b16 %v330
  %v436 = vunpack.c.l.b16 %v331
  %v437 = vunpack.c.h.b16 %v331
  %v438 = vpack.c.b16 %v378, %v374
  %v439 = vpack.c.b16 %v379, %v375
  %v440 = vpack.c.b16 %v380, %v376
  %v441 = vpack.c.b16 %v381, %v377
  %v442 = vpack.c.b16 %v386, %v382
  %v443 = vpack.c.b16 %v387, %v383
  %v444 = vpack.c.b16 %v388, %v384
  %v445 = vpack.c.b16 %v389, %v385
  %v446 = vpack.c.b16 %v394, %v390
  %v447 = vpack.c.b16 %v395, %v391
  %v448 = vpack.c.b16 %v396, %v392
  %v449 = vpack.c.b16 %v397, %v393
  %v450 = vpack.c.b16 %v402, %v398
  %v451 = vpack.c.b16 %v403, %v399
  %v452 = vpack.c.b16 %v404, %v400
  %v453 = vpack.c.b16 %v405, %v401
  %v454 = vpack.c.b16 %v410, %v406
  %v455 = vpack.c.b16 %v411, %v407
  %v456 = vpack.c.b16 %v412, %v408
  %v457 = vpack.c.b16 %v413, %v409
  %v458 = vpack.c.b16 %v418, %v414
  %v459 = vpack.c.b16 %v419, %v415
  %v460 = vpack.c.b16 %v420, %v416
  %v461 = vpack.c.b16 %v421, %v417
  %v462 = vpack.c.b16 %v426, %v422
  %v463 = vpack.c.b16 %v427, %v423
  %v464 = vpack.c.b16 %v428, %v424
  %v465 = vpack.c.b16 %v429, %v425
  %v466 = vpack.c.b16 %v434, %v430
  %v467 = vpack.c.b16 %v435, %v431
  %v468 = vpack.c.b16 %v436, %v432
  %v469 = vpack.c.b16 %v437, %v433
  %502 = vmatprep.subr.bf16.mxu0 %v439
  %503 = vmatpush1.bf16.msra.mxu0 %v438
  %504 = vmatprep.subr.bf16.mxu0 %v443
  %505 = vmatpush1.bf16.msra.mxu0 %v442
  %506 = vmatprep.subr.bf16.mxu0 %v447
  %507 = vmatpush1.bf16.msra.mxu0 %v446
  %508 = vmatprep.subr.bf16.mxu0 %v451
  %509 = vmatpush1.bf16.msra.mxu0 %v450
  %510 = vmatprep.subr.bf16.mxu0 %v455
  %511 = vmatpush1.bf16.msra.mxu0 %v454
  %512 = vmatprep.subr.bf16.mxu0 %v459
  %513 = vmatpush1.bf16.msra.mxu0 %v458
  %514 = vmatprep.subr.bf16.mxu0 %v463
  %515 = vmatpush1.bf16.msra.mxu0 %v462
  %516 = vmatprep.subr.bf16.mxu0 %v467
  %517 = vmatpush1.bf16.msra.mxu0 %v466
  %518 = vmatprep.subr.bf16.mxu0 0
  %519 = vmatpush1.bf16.msra.mxu0 0
  %520 = vmatprep.subr.bf16.mxu0 0
  %521 = vmatpush1.bf16.msra.mxu0 0
  %522 = vmatprep.subr.bf16.mxu0 0
  %523 = vmatpush1.bf16.msra.mxu0 0
  %524 = vmatprep.subr.bf16.mxu0 0
  %525 = vmatpush1.bf16.msra.mxu0 0
  %526 = vmatprep.subr.bf16.mxu0 0
  %527 = vmatpush1.bf16.msra.mxu0 0
  %528 = vmatprep.subr.bf16.mxu0 0
  %529 = vmatpush1.bf16.msra.mxu0 0
  %530 = vmatprep.subr.bf16.mxu0 0
  %531 = vmatpush1.bf16.msra.mxu0 0
  %532 = vmatprep.subr.bf16.mxu0 0
  %533 = vmatpush1.bf16.msra.mxu0 0
  %534 = vmatprep.mubr.bf16.mxu0 0
  %535 = vmatmul.mubr.bf16.gmra.mrb[0].mxu0 %v341
  %v536 = vpop.f32.mrb[0].mxu0
  %v537 = vadd.f32 0.0, %v536
  %v538 = vpop.f32.mrb[0].mxu0
  %v539 = vadd.f32 0.0, %v538
  %v540 = vpop.f32.mrb[0].mxu0
  %v541 = vpop.f32.mrb[0].mxu0
  %542 = vdwg.mxu0
  %543 = vmatprep.subr.bf16.mxu0 %v441
  %544 = vmatpush1.bf16.msra.mxu0 %v440
  %545 = vmatprep.subr.bf16.mxu0 %v445
  %546 = vmatpush1.bf16.msra.mxu0 %v444
  %547 = vmatprep.subr.bf16.mxu0 %v449
  %548 = vmatpush1.bf16.msra.mxu0 %v448
  %549 = vmatprep.subr.bf16.mxu0 %v453
  %550 = vmatpush1.bf16.msra.mxu0 %v452
  %551 = vmatprep.subr.bf16.mxu0 %v457
  %552 = vmatpush1.bf16.msra.mxu0 %v456
  %553 = vmatprep.subr.bf16.mxu0 %v461
  %554 = vmatpush1.bf16.msra.mxu0 %v460
  %555 = vmatprep.subr.bf16.mxu0 %v465
  %556 = vmatpush1.bf16.msra.mxu0 %v464
  %557 = vmatprep.subr.bf16.mxu0 %v469
  %558 = vmatpush1.bf16.msra.mxu0 %v468
  %559 = vmatprep.subr.bf16.mxu0 0
  %560 = vmatpush1.bf16.msra.mxu0 0
  %561 = vmatprep.subr.bf16.mxu0 0
  %562 = vmatpush1.bf16.msra.mxu0 0
  %563 = vmatprep.subr.bf16.mxu0 0
  %564 = vmatpush1.bf16.msra.mxu0 0
  %565 = vmatprep.subr.bf16.mxu0 0
  %566 = vmatpush1.bf16.msra.mxu0 0
  %567 = vmatprep.subr.bf16.mxu0 0
  %568 = vmatpush1.bf16.msra.mxu0 0
  %569 = vmatprep.subr.bf16.mxu0 0
  %570 = vmatpush1.bf16.msra.mxu0 0
  %571 = vmatprep.subr.bf16.mxu0 0
  %572 = vmatpush1.bf16.msra.mxu0 0
  %573 = vmatprep.subr.bf16.mxu0 0
  %574 = vmatpush1.bf16.msra.mxu0 0
  %575 = vmatprep.mubr.bf16.mxu0 0
  %576 = vmatmul.mubr.bf16.gmra.mrb[0].mxu0 %v341
  %v577 = vpop.f32.mrb[0].mxu0
  %v578 = vadd.f32 0.0, %v577
  %v579 = vpop.f32.mrb[0].mxu0
  %v580 = vadd.f32 0.0, %v579
  %v581 = vpop.f32.mrb[0].mxu0
  %v582 = vpop.f32.mrb[0].mxu0
  %583 = vdwg.mxu0
  %v584 = vadd.f32 %v337, %v537
  %v585 = vadd.f32 %v338, %v539
  %v586 = vadd.f32 %v339, %v578
  %v587 = vadd.f32 %v340, %v580
  %v588 = vxor.u32 %v584, 2147483648
  %v589 = vmul.f32 %v588, 1.442695
  %v590 = vpow.pop %v589
  %v591 = vadd.f32 %v590, 1.0
  %v592 = vrcp.pop %v591
  %v593 = vmul.f32 1.0, %v592
  %v594 = vxor.u32 %v585, 2147483648
  %v595 = vmul.f32 %v594, 1.442695
  %v596 = vpow.pop %v595
  %v597 = vadd.f32 %v596, 1.0
  %v598 = vrcp.pop %v597
  %v599 = vmul.f32 1.0, %v598
  %v600 = vtanh.pop %v586
  %v601 = vxor.u32 %v587, 2147483648
  %v602 = vmul.f32 %v601, 1.442695
  %v603 = vpow.pop %v602
  %v604 = vadd.f32 %v603, 1.0
  %v605 = vrcp.pop %v604
  %v606 = vmul.f32 1.0, %v605
  %v607 = vmul.f32 %v599, %v333
  %v608 = vmul.f32 %v593, %v600
  %v609 = vadd.f32 %v607, %v608
  %v610 = vtanh.pop %v609
  %v611 = vmul.f32 %v606, %v610
  %612 = vst [vmem:[%s6] sm:$0xff] %v611
  %s613 = smul.u32 1, 4
  %s614 = smul.addr %s613, 8
  %s615 = scalar_lea.vmem [#allocation2], %s614
  %v616 = vld [vmem:[%s615] sm:$0xff]
  %v617 = vld [vmem:[%s615 + $0x8] sm:$0xff]
  %v618 = vld [vmem:[%s615 + $0x10] sm:$0xff]
  %v619 = vld [vmem:[%s615 + $0x18] sm:$0xff]
  %v620 = vpack.c.bf16 %v611, %v611
  %621 = vmatprep.subr.bf16.mxu0 %v439
  %622 = vmatpush1.bf16.msra.mxu0 %v438
  %623 = vmatprep.subr.bf16.mxu0 %v443
  %624 = vmatpush1.bf16.msra.mxu0 %v442
  %625 = vmatprep.subr.bf16.mxu0 %v447
  %626 = vmatpush1.bf16.msra.mxu0 %v446
  %627 = vmatprep.subr.bf16.mxu0 %v451
  %628 = vmatpush1.bf16.msra.mxu0 %v450
  %629 = vmatprep.subr.bf16.mxu0 %v455
  %630 = vmatpush1.bf16.msra.mxu0 %v454
  %631 = vmatprep.subr.bf16.mxu0 %v459
  %632 = vmatpush1.bf16.msra.mxu0 %v458
  %633 = vmatprep.subr.bf16.mxu0 %v463
  %634 = vmatpush1.bf16.msra.mxu0 %v462
  %635 = vmatprep.subr.bf16.mxu0 %v467
  %636 = vmatpush1.bf16.msra.mxu0 %v466
  %637 = vmatprep.subr.bf16.mxu0 0
  %638 = vmatpush1.bf16.msra.mxu0 0
  %639 = vmatprep.subr.bf16.mxu0 0
  %640 = vmatpush1.bf16.msra.mxu0 0
  %641 = vmatprep.subr.bf16.mxu0 0
  %642 = vmatpush1.bf16.msra.mxu0 0
  %643 = vmatprep.subr.bf16.mxu0 0
  %644 = vmatpush1.bf16.msra.mxu0 0
  %645 = vmatprep.subr.bf16.mxu0 0
  %646 = vmatpush1.bf16.msra.mxu0 0
  %647 = vmatprep.subr.bf16.mxu0 0
  %648 = vmatpush1.bf16.msra.mxu0 0
  %649 = vmatprep.subr.bf16.mxu0 0
  %650 = vmatpush1.bf16.msra.mxu0 0
  %651 = vmatprep.subr.bf16.mxu0 0
  %652 = vmatpush1.bf16.msra.mxu0 0
  %653 = vmatprep.mubr.bf16.mxu0 0
  %654 = vmatmul.mubr.bf16.gmra.mrb[0].mxu0 %v620
  %v655 = vpop.f32.mrb[0].mxu0
  %v656 = vadd.f32 0.0, %v655
  %v657 = vpop.f32.mrb[0].mxu0
  %v658 = vadd.f32 0.0, %v657
  %v659 = vpop.f32.mrb[0].mxu0
  %v660 = vpop.f32.mrb[0].mxu0
  %661 = vdwg.mxu0
  %662 = vmatprep.subr.bf16.mxu0 %v441
  %663 = vmatpush1.bf16.msra.mxu0 %v440
  %664 = vmatprep.subr.bf16.mxu0 %v445
  %665 = vmatpush1.bf16.msra.mxu0 %v444
  %666 = vmatprep.subr.bf16.mxu0 %v449
  %667 = vmatpush1.bf16.msra.mxu0 %v448
  %668 = vmatprep.subr.bf16.mxu0 %v453
  %669 = vmatpush1.bf16.msra.mxu0 %v452
  %670 = vmatprep.subr.bf16.mxu0 %v457
  %671 = vmatpush1.bf16.msra.mxu0 %v456
  %672 = vmatprep.subr.bf16.mxu0 %v461
  %673 = vmatpush1.bf16.msra.mxu0 %v460
  %674 = vmatprep.subr.bf16.mxu0 %v465
  %675 = vmatpush1.bf16.msra.mxu0 %v464
  %676 = vmatprep.subr.bf16.mxu0 %v469
  %677 = vmatpush1.bf16.msra.mxu0 %v468
  %678 = vmatprep.subr.bf16.mxu0 0
  %679 = vmatpush1.bf16.msra.mxu0 0
  %680 = vmatprep.subr.bf16.mxu0 0
  %681 = vmatpush1.bf16.msra.mxu0 0
  %682 = vmatprep.subr.bf16.mxu0 0
  %683 = vmatpush1.bf16.msra.mxu0 0
  %684 = vmatprep.subr.bf16.mxu0 0
  %685 = vmatpush1.bf16.msra.mxu0 0
  %686 = vmatprep.subr.bf16.mxu0 0
  %687 = vmatpush1.bf16.msra.mxu0 0
  %688 = vmatprep.subr.bf16.mxu0 0
  %689 = vmatpush1.bf16.msra.mxu0 0
  %690 = vmatprep.subr.bf16.mxu0 0
  %691 = vmatpush1.bf16.msra.mxu0 0
  %692 = vmatprep.subr.bf16.mxu0 0
  %693 = vmatpush1.bf16.msra.mxu0 0
  %694 = vmatprep.mubr.bf16.mxu0 0
  %695 = vmatmul.mubr.bf16.gmra.mrb[0].mxu0 %v620
  %v696 = vpop.f32.mrb[0].mxu0
  %v697 = vadd.f32 0.0, %v696
  %v698 = vpop.f32.mrb[0].mxu0
  %v699 = vadd.f32 0.0, %v698
  %v700 = vpop.f32.mrb[0].mxu0
  %v701 = vpop.f32.mrb[0].mxu0
  %702 = vdwg.mxu0
  %v703 = vadd.f32 %v616, %v656
  %v704 = vadd.f32 %v617, %v658
  %v705 = vadd.f32 %v618, %v697
  %v706 = vadd.f32 %v619, %v699
  %v707 = vxor.u32 %v703, 2147483648
  %v708 = vmul.f32 %v707, 1.442695
  %v709 = vpow.pop %v708
  %v710 = vadd.f32 %v709, 1.0
  %v711 = vrcp.pop %v710
  %v712 = vmul.f32 1.0, %v711
  %v713 = vxor.u32 %v704, 2147483648
  %v714 = vmul.f32 %v713, 1.442695
  %v715 = vpow.pop %v714
  %v716 = vadd.f32 %v715, 1.0
  %v717 = vrcp.pop %v716
  %v718 = vmul.f32 1.0, %v717
  %v719 = vtanh.pop %v705
  %v720 = vxor.u32 %v706, 2147483648
  %v721 = vmul.f32 %v720, 1.442695
  %v722 = vpow.pop %v721
  %v723 = vadd.f32 %v722, 1.0
  %v724 = vrcp.pop %v723
  %v725 = vmul.f32 1.0, %v724
  %v726 = vmul.f32 %v718, %v609
  %v727 = vmul.f32 %v712, %v719
  %v728 = vadd.f32 %v726, %v727
  %v729 = vtanh.pop %v728
  %v730 = vmul.f32 %v725, %v729
  %s731 = scalar_lea.vmem %s6, 8
  %732 = vst [vmem:[%s731] sm:$0xff] %v730
  %s733 = smul.u32 2, 4
  %s734 = smul.addr %s733, 8
  %s735 = scalar_lea.vmem [#allocation2], %s734
  %v736 = vld [vmem:[%s735] sm:$0xff]
  %v737 = vld [vmem:[%s735 + $0x8] sm:$0xff]
  %v738 = vld [vmem:[%s735 + $0x10] sm:$0xff]
  %v739 = vld [vmem:[%s735 + $0x18] sm:$0xff]
  %v740 = vpack.c.bf16 %v730, %v730
  %741 = vmatprep.subr.bf16.mxu0 %v439
  %742 = vmatpush1.bf16.msra.mxu0 %v438
  %743 = vmatprep.subr.bf16.mxu0 %v443
  %744 = vmatpush1.bf16.msra.mxu0 %v442
  %745 = vmatprep.subr.bf16.mxu0 %v447
  %746 = vmatpush1.bf16.msra.mxu0 %v446
  %747 = vmatprep.subr.bf16.mxu0 %v451
  %748 = vmatpush1.bf16.msra.mxu0 %v450
  %749 = vmatprep.subr.bf16.mxu0 %v455
  %750 = vmatpush1.bf16.msra.mxu0 %v454
  %751 = vmatprep.subr.bf16.mxu0 %v459
  %752 = vmatpush1.bf16.msra.mxu0 %v458
  %753 = vmatprep.subr.bf16.mxu0 %v463
  %754 = vmatpush1.bf16.msra.mxu0 %v462
  %755 = vmatprep.subr.bf16.mxu0 %v467
  %756 = vmatpush1.bf16.msra.mxu0 %v466
  %757 = vmatprep.subr.bf16.mxu0 0
  %758 = vmatpush1.bf16.msra.mxu0 0
  %759 = vmatprep.subr.bf16.mxu0 0
  %760 = vmatpush1.bf16.msra.mxu0 0
  %761 = vmatprep.subr.bf16.mxu0 0
  %762 = vmatpush1.bf16.msra.mxu0 0
  %763 = vmatprep.subr.bf16.mxu0 0
  %764 = vmatpush1.bf16.msra.mxu0 0
  %765 = vmatprep.subr.bf16.mxu0 0
  %766 = vmatpush1.bf16.msra.mxu0 0
  %767 = vmatprep.subr.bf16.mxu0 0
  %768 = vmatpush1.bf16.msra.mxu0 0
  %769 = vmatprep.subr.bf16.mxu0 0
  %770 = vmatpush1.bf16.msra.mxu0 0
  %771 = vmatprep.subr.bf16.mxu0 0
  %772 = vmatpush1.bf16.msra.mxu0 0
  %773 = vmatprep.mubr.bf16.mxu0 0
  %774 = vmatmul.mubr.bf16.gmra.mrb[0].mxu0 %v740
  %v775 = vpop.f32.mrb[0].mxu0
  %v776 = vadd.f32 0.0, %v775
  %v777 = vpop.f32.mrb[0].mxu0
  %v778 = vadd.f32 0.0, %v777
  %v779 = vpop.f32.mrb[0].mxu0
  %v780 = vpop.f32.mrb[0].mxu0
  %781 = vdwg.mxu0
  %782 = vmatprep.subr.bf16.mxu0 %v441
  %783 = vmatpush1.bf16.msra.mxu0 %v440
  %784 = vmatprep.subr.bf16.mxu0 %v445
  %785 = vmatpush1.bf16.msra.mxu0 %v444
  %786 = vmatprep.subr.bf16.mxu0 %v449
  %787 = vmatpush1.bf16.msra.mxu0 %v448
  %788 = vmatprep.subr.bf16.mxu0 %v453
  %789 = vmatpush1.bf16.msra.mxu0 %v452
  %790 = vmatprep.subr.bf16.mxu0 %v457
  %791 = vmatpush1.bf16.msra.mxu0 %v456
  %792 = vmatprep.subr.bf16.mxu0 %v461
  %793 = vmatpush1.bf16.msra.mxu0 %v460
  %794 = vmatprep.subr.bf16.mxu0 %v465
  %795 = vmatpush1.bf16.msra.mxu0 %v464
  %796 = vmatprep.subr.bf16.mxu0 %v469
  %797 = vmatpush1.bf16.msra.mxu0 %v468
  %798 = vmatprep.subr.bf16.mxu0 0
  %799 = vmatpush1.bf16.msra.mxu0 0
  %800 = vmatprep.subr.bf16.mxu0 0
  %801 = vmatpush1.bf16.msra.mxu0 0
  %802 = vmatprep.subr.bf16.mxu0 0
  %803 = vmatpush1.bf16.msra.mxu0 0
  %804 = vmatprep.subr.bf16.mxu0 0
  %805 = vmatpush1.bf16.msra.mxu0 0
  %806 = vmatprep.subr.bf16.mxu0 0
  %807 = vmatpush1.bf16.msra.mxu0 0
  %808 = vmatprep.subr.bf16.mxu0 0
  %809 = vmatpush1.bf16.msra.mxu0 0
  %810 = vmatprep.subr.bf16.mxu0 0
  %811 = vmatpush1.bf16.msra.mxu0 0
  %812 = vmatprep.subr.bf16.mxu0 0
  %813 = vmatpush1.bf16.msra.mxu0 0
  %814 = vmatprep.mubr.bf16.mxu0 0
  %815 = vmatmul.mubr.bf16.gmra.mrb[0].mxu0 %v740
  %v816 = vpop.f32.mrb[0].mxu0
  %v817 = vadd.f32 0.0, %v816
  %v818 = vpop.f32.mrb[0].mxu0
  %v819 = vadd.f32 0.0, %v818
  %v820 = vpop.f32.mrb[0].mxu0
  %v821 = vpop.f32.mrb[0].mxu0
  %822 = vdwg.mxu0
  %v823 = vadd.f32 %v736, %v776
  %v824 = vadd.f32 %v737, %v778
  %v825 = vadd.f32 %v738, %v817
  %v826 = vadd.f32 %v739, %v819
  %v827 = vxor.u32 %v823, 2147483648
  %v828 = vmul.f32 %v827, 1.442695
  %v829 = vpow.pop %v828
  %v830 = vadd.f32 %v829, 1.0
  %v831 = vrcp.pop %v830
  %v832 = vmul.f32 1.0, %v831
  %v833 = vxor.u32 %v824, 2147483648
  %v834 = vmul.f32 %v833, 1.442695
  %v835 = vpow.pop %v834
  %v836 = vadd.f32 %v835, 1.0
  %v837 = vrcp.pop %v836
  %v838 = vmul.f32 1.0, %v837
  %v839 = vtanh.pop %v825
  %v840 = vxor.u32 %v826, 2147483648
  %v841 = vmul.f32 %v840, 1.442695
  %v842 = vpow.pop %v841
  %v843 = vadd.f32 %v842, 1.0
  %v844 = vrcp.pop %v843
  %v845 = vmul.f32 1.0, %v844
  %v846 = vmul.f32 %v838, %v728
  %v847 = vmul.f32 %v832, %v839
  %v848 = vadd.f32 %v846, %v847
  %v849 = vtanh.pop %v848
  %v850 = vmul.f32 %v845, %v849
  %s851 = scalar_lea.vmem %s6, 16
  %852 = vst [vmem:[%s851] sm:$0xff] %v850
  %s853 = smul.u32 3, 4
  %s854 = smul.addr %s853, 8
  %s855 = scalar_lea.vmem [#allocation2], %s854
  %v856 = vld [vmem:[%s855] sm:$0xff]
  %v857 = vld [vmem:[%s855 + $0x8] sm:$0xff]
  %v858 = vld [vmem:[%s855 + $0x10] sm:$0xff]
  %v859 = vld [vmem:[%s855 + $0x18] sm:$0xff]
  %v860 = vpack.c.bf16 %v850, %v850
  %861 = vmatprep.subr.bf16.mxu0 %v439
  %862 = vmatpush1.bf16.msra.mxu0 %v438
  %863 = vmatprep.subr.bf16.mxu0 %v443
  %864 = vmatpush1.bf16.msra.mxu0 %v442
  %865 = vmatprep.subr.bf16.mxu0 %v447
  %866 = vmatpush1.bf16.msra.mxu0 %v446
  %867 = vmatprep.subr.bf16.mxu0 %v451
  %868 = vmatpush1.bf16.msra.mxu0 %v450
  %869 = vmatprep.subr.bf16.mxu0 %v455
  %870 = vmatpush1.bf16.msra.mxu0 %v454
  %871 = vmatprep.subr.bf16.mxu0 %v459
  %872 = vmatpush1.bf16.msra.mxu0 %v458
  %873 = vmatprep.subr.bf16.mxu0 %v463
  %874 = vmatpush1.bf16.msra.mxu0 %v462
  %875 = vmatprep.subr.bf16.mxu0 %v467
  %876 = vmatpush1.bf16.msra.mxu0 %v466
  %877 = vmatprep.subr.bf16.mxu0 0
  %878 = vmatpush1.bf16.msra.mxu0 0
  %879 = vmatprep.subr.bf16.mxu0 0
  %880 = vmatpush1.bf16.msra.mxu0 0
  %881 = vmatprep.subr.bf16.mxu0 0
  %882 = vmatpush1.bf16.msra.mxu0 0
  %883 = vmatprep.subr.bf16.mxu0 0
  %884 = vmatpush1.bf16.msra.mxu0 0
  %885 = vmatprep.subr.bf16.mxu0 0
  %886 = vmatpush1.bf16.msra.mxu0 0
  %887 = vmatprep.subr.bf16.mxu0 0
  %888 = vmatpush1.bf16.msra.mxu0 0
  %889 = vmatprep.subr.bf16.mxu0 0
  %890 = vmatpush1.bf16.msra.mxu0 0
  %891 = vmatprep.subr.bf16.mxu0 0
  %892 = vmatpush1.bf16.msra.mxu0 0
  %893 = vmatprep.mubr.bf16.mxu0 0
  %894 = vmatmul.mubr.bf16.gmra.mrb[0].mxu0 %v860
  %v895 = vpop.f32.mrb[0].mxu0
  %v896 = vadd.f32 0.0, %v895
  %v897 = vpop.f32.mrb[0].mxu0
  %v898 = vadd.f32 0.0, %v897
  %v899 = vpop.f32.mrb[0].mxu0
  %v900 = vpop.f32.mrb[0].mxu0
  %901 = vdwg.mxu0
  %902 = vmatprep.subr.bf16.mxu0 %v441
  %903 = vmatpush1.bf16.msra.mxu0 %v440
  %904 = vmatprep.subr.bf16.mxu0 %v445
  %905 = vmatpush1.bf16.msra.mxu0 %v444
  %906 = vmatprep.subr.bf16.mxu0 %v449
  %907 = vmatpush1.bf16.msra.mxu0 %v448
  %908 = vmatprep.subr.bf16.mxu0 %v453
  %909 = vmatpush1.bf16.msra.mxu0 %v452
  %910 = vmatprep.subr.bf16.mxu0 %v457
  %911 = vmatpush1.bf16.msra.mxu0 %v456
  %912 = vmatprep.subr.bf16.mxu0 %v461
  %913 = vmatpush1.bf16.msra.mxu0 %v460
  %914 = vmatprep.subr.bf16.mxu0 %v465
  %915 = vmatpush1.bf16.msra.mxu0 %v464
  %916 = vmatprep.subr.bf16.mxu0 %v469
  %917 = vmatpush1.bf16.msra.mxu0 %v468
  %918 = vmatprep.subr.bf16.mxu0 0
  %919 = vmatpush1.bf16.msra.mxu0 0
  %920 = vmatprep.subr.bf16.mxu0 0
  %921 = vmatpush1.bf16.msra.mxu0 0
  %922 = vmatprep.subr.bf16.mxu0 0
  %923 = vmatpush1.bf16.msra.mxu0 0
  %924 = vmatprep.subr.bf16.mxu0 0
  %925 = vmatpush1.bf16.msra.mxu0 0
  %926 = vmatprep.subr.bf16.mxu0 0
  %927 = vmatpush1.bf16.msra.mxu0 0
  %928 = vmatprep.subr.bf16.mxu0 0
  %929 = vmatpush1.bf16.msra.mxu0 0
  %930 = vmatprep.subr.bf16.mxu0 0
  %931 = vmatpush1.bf16.msra.mxu0 0
  %932 = vmatprep.subr.bf16.mxu0 0
  %933 = vmatpush1.bf16.msra.mxu0 0
  %934 = vmatprep.mubr.bf16.mxu0 0
  %935 = vmatmul.mubr.bf16.gmra.mrb[0].mxu0 %v860
  %v936 = vpop.f32.mrb[0].mxu0
  %v937 = vadd.f32 0.0, %v936
  %v938 = vpop.f32.mrb[0].mxu0
  %v939 = vadd.f32 0.0, %v938
  %v940 = vpop.f32.mrb[0].mxu0
  %v941 = vpop.f32.mrb[0].mxu0
  %942 = vdwg.mxu0
  %v943 = vadd.f32 %v856, %v896
  %v944 = vadd.f32 %v857, %v898
  %v945 = vadd.f32 %v858, %v937
  %v946 = vadd.f32 %v859, %v939
  %v947 = vxor.u32 %v943, 2147483648
  %v948 = vmul.f32 %v947, 1.442695
  %v949 = vpow.pop %v948
  %v950 = vadd.f32 %v949, 1.0
  %v951 = vrcp.pop %v950
  %v952 = vmul.f32 1.0, %v951
  %v953 = vxor.u32 %v944, 2147483648
  %v954 = vmul.f32 %v953, 1.442695
  %v955 = vpow.pop %v954
  %v956 = vadd.f32 %v955, 1.0
  %v957 = vrcp.pop %v956
  %v958 = vmul.f32 1.0, %v957
  %v959 = vtanh.pop %v945
  %v960 = vxor.u32 %v946, 2147483648
  %v961 = vmul.f32 %v960, 1.442695
  %v962 = vpow.pop %v961
  %v963 = vadd.f32 %v962, 1.0
  %v964 = vrcp.pop %v963
  %v965 = vmul.f32 1.0, %v964
  %v966 = vmul.f32 %v958, %v848
  %v967 = vmul.f32 %v952, %v959
  %v968 = vadd.f32 %v966, %v967
  %v969 = vtanh.pop %v968
  %v970 = vmul.f32 %v965, %v969
  %s971 = scalar_lea.vmem %s6, 24
  %972 = vst [vmem:[%s971] sm:$0xff] %v970
  %s973 = smul.u32 4, 4
  %s974 = smul.addr %s973, 8
  %s975 = scalar_lea.vmem [#allocation2], %s974
  %v976 = vld [vmem:[%s975] sm:$0xff]
  %v977 = vld [vmem:[%s975 + $0x8] sm:$0xff]
  %v978 = vld [vmem:[%s975 + $0x10] sm:$0xff]
  %v979 = vld [vmem:[%s975 + $0x18] sm:$0xff]
  %v980 = vpack.c.bf16 %v970, %v970
  %981 = vmatprep.subr.bf16.mxu0 %v439
  %982 = vmatpush1.bf16.msra.mxu0 %v438
  %983 = vmatprep.subr.bf16.mxu0 %v443
  %984 = vmatpush1.bf16.msra.mxu0 %v442
  %985 = vmatprep.subr.bf16.mxu0 %v447
  %986 = vmatpush1.bf16.msra.mxu0 %v446
  %987 = vmatprep.subr.bf16.mxu0 %v451
  %988 = vmatpush1.bf16.msra.mxu0 %v450
  %989 = vmatprep.subr.bf16.mxu0 %v455
  %990 = vmatpush1.bf16.msra.mxu0 %v454
  %991 = vmatprep.subr.bf16.mxu0 %v459
  %992 = vmatpush1.bf16.msra.mxu0 %v458
  %993 = vmatprep.subr.bf16.mxu0 %v463
  %994 = vmatpush1.bf16.msra.mxu0 %v462
  %995 = vmatprep.subr.bf16.mxu0 %v467
  %996 = vmatpush1.bf16.msra.mxu0 %v466
  %997 = vmatprep.subr.bf16.mxu0 0
  %998 = vmatpush1.bf16.msra.mxu0 0
  %999 = vmatprep.subr.bf16.mxu0 0
  %1000 = vmatpush1.bf16.msra.mxu0 0
  %1001 = vmatprep.subr.bf16.mxu0 0
  %1002 = vmatpush1.bf16.msra.mxu0 0
  %1003 = vmatprep.subr.bf16.mxu0 0
  %1004 = vmatpush1.bf16.msra.mxu0 0
  %1005 = vmatprep.subr.bf16.mxu0 0
  %1006 = vmatpush1.bf16.msra.mxu0 0
  %1007 = vmatprep.subr.bf16.mxu0 0
  %1008 = vmatpush1.bf16.msra.mxu0 0
  %1009 = vmatprep.subr.bf16.mxu0 0
  %1010 = vmatpush1.bf16.msra.mxu0 0
  %1011 = vmatprep.subr.bf16.mxu0 0
  %1012 = vmatpush1.bf16.msra.mxu0 0
  %1013 = vmatprep.mubr.bf16.mxu0 0
  %1014 = vmatmul.mubr.bf16.gmra.mrb[0].mxu0 %v980
  %v1015 = vpop.f32.mrb[0].mxu0
  %v1016 = vadd.f32 0.0, %v1015
  %v1017 = vpop.f32.mrb[0].mxu0
  %v1018 = vadd.f32 0.0, %v1017
  %v1019 = vpop.f32.mrb[0].mxu0
  %v1020 = vpop.f32.mrb[0].mxu0
  %1021 = vdwg.mxu0
  %1022 = vmatprep.subr.bf16.mxu0 %v441
  %1023 = vmatpush1.bf16.msra.mxu0 %v440
  %1024 = vmatprep.subr.bf16.mxu0 %v445
  %1025 = vmatpush1.bf16.msra.mxu0 %v444
  %1026 = vmatprep.subr.bf16.mxu0 %v449
  %1027 = vmatpush1.bf16.msra.mxu0 %v448
  %1028 = vmatprep.subr.bf16.mxu0 %v453
  %1029 = vmatpush1.bf16.msra.mxu0 %v452
  %1030 = vmatprep.subr.bf16.mxu0 %v457
  %1031 = vmatpush1.bf16.msra.mxu0 %v456
  %1032 = vmatprep.subr.bf16.mxu0 %v461
  %1033 = vmatpush1.bf16.msra.mxu0 %v460
  %1034 = vmatprep.subr.bf16.mxu0 %v465
  %1035 = vmatpush1.bf16.msra.mxu0 %v464
  %1036 = vmatprep.subr.bf16.mxu0 %v469
  %1037 = vmatpush1.bf16.msra.mxu0 %v468
  %1038 = vmatprep.subr.bf16.mxu0 0
  %1039 = vmatpush1.bf16.msra.mxu0 0
  %1040 = vmatprep.subr.bf16.mxu0 0
  %1041 = vmatpush1.bf16.msra.mxu0 0
  %1042 = vmatprep.subr.bf16.mxu0 0
  %1043 = vmatpush1.bf16.msra.mxu0 0
  %1044 = vmatprep.subr.bf16.mxu0 0
  %1045 = vmatpush1.bf16.msra.mxu0 0
  %1046 = vmatprep.subr.bf16.mxu0 0
  %1047 = vmatpush1.bf16.msra.mxu0 0
  %1048 = vmatprep.subr.bf16.mxu0 0
  %1049 = vmatpush1.bf16.msra.mxu0 0
  %1050 = vmatprep.subr.bf16.mxu0 0
  %1051 = vmatpush1.bf16.msra.mxu0 0
  %1052 = vmatprep.subr.bf16.mxu0 0
  %1053 = vmatpush1.bf16.msra.mxu0 0
  %1054 = vmatprep.mubr.bf16.mxu0 0
  %1055 = vmatmul.mubr.bf16.gmra.mrb[0].mxu0 %v980
  %v1056 = vpop.f32.mrb[0].mxu0
  %v1057 = vadd.f32 0.0, %v1056
  %v1058 = vpop.f32.mrb[0].mxu0
  %v1059 = vadd.f32 0.0, %v1058
  %v1060 = vpop.f32.mrb[0].mxu0
  %v1061 = vpop.f32.mrb[0].mxu0
  %1062 = vdwg.mxu0
  %v1063 = vadd.f32 %v976, %v1016
  %v1064 = vadd.f32 %v977, %v1018
  %v1065 = vadd.f32 %v978, %v1057
  %v1066 = vadd.f32 %v979, %v1059
  %v1067 = vxor.u32 %v1063, 2147483648
  %v1068 = vmul.f32 %v1067, 1.442695
  %v1069 = vpow.pop %v1068
  %v1070 = vadd.f32 %v1069, 1.0
  %v1071 = vrcp.pop %v1070
  %v1072 = vmul.f32 1.0, %v1071
  %v1073 = vxor.u32 %v1064, 2147483648
  %v1074 = vmul.f32 %v1073, 1.442695
  %v1075 = vpow.pop %v1074
  %v1076 = vadd.f32 %v1075, 1.0
  %v1077 = vrcp.pop %v1076
  %v1078 = vmul.f32 1.0, %v1077
  %v1079 = vtanh.pop %v1065
  %v1080 = vxor.u32 %v1066, 2147483648
  %v1081 = vmul.f32 %v1080, 1.442695
  %v1082 = vpow.pop %v1081
  %v1083 = vadd.f32 %v1082, 1.0
  %v1084 = vrcp.pop %v1083
  %v1085 = vmul.f32 1.0, %v1084
  %v1086 = vmul.f32 %v1078, %v968
  %v1087 = vmul.f32 %v1072, %v1079
  %v1088 = vadd.f32 %v1086, %v1087
  %v1089 = vtanh.pop %v1088
  %v1090 = vmul.f32 %v1085, %v1089
  %s1091 = scalar_lea.vmem %s6, 32
  %1092 = vst [vmem:[%s1091] sm:$0xff] %v1090
  %s1093 = smul.u32 5, 4
  %s1094 = smul.addr %s1093, 8
  %s1095 = scalar_lea.vmem [#allocation2], %s1094
  %v1096 = vld [vmem:[%s1095] sm:$0xff]
  %v1097 = vld [vmem:[%s1095 + $0x8] sm:$0xff]
  %v1098 = vld [vmem:[%s1095 + $0x10] sm:$0xff]
  %v1099 = vld [vmem:[%s1095 + $0x18] sm:$0xff]
  %v1100 = vpack.c.bf16 %v1090, %v1090
  %1101 = vmatprep.subr.bf16.mxu0 %v439
  %1102 = vmatpush1.bf16.msra.mxu0 %v438
  %1103 = vmatprep.subr.bf16.mxu0 %v443
  %1104 = vmatpush1.bf16.msra.mxu0 %v442
  %1105 = vmatprep.subr.bf16.mxu0 %v447
  %1106 = vmatpush1.bf16.msra.mxu0 %v446
  %1107 = vmatprep.subr.bf16.mxu0 %v451
  %1108 = vmatpush1.bf16.msra.mxu0 %v450
  %1109 = vmatprep.subr.bf16.mxu0 %v455
  %1110 = vmatpush1.bf16.msra.mxu0 %v454
  %1111 = vmatprep.subr.bf16.mxu0 %v459
  %1112 = vmatpush1.bf16.msra.mxu0 %v458
  %1113 = vmatprep.subr.bf16.mxu0 %v463
  %1114 = vmatpush1.bf16.msra.mxu0 %v462
  %1115 = vmatprep.subr.bf16.mxu0 %v467
  %1116 = vmatpush1.bf16.msra.mxu0 %v466
  %1117 = vmatprep.subr.bf16.mxu0 0
  %1118 = vmatpush1.bf16.msra.mxu0 0
  %1119 = vmatprep.subr.bf16.mxu0 0
  %1120 = vmatpush1.bf16.msra.mxu0 0
  %1121 = vmatprep.subr.bf16.mxu0 0
  %1122 = vmatpush1.bf16.msra.mxu0 0
  %1123 = vmatprep.subr.bf16.mxu0 0
  %1124 = vmatpush1.bf16.msra.mxu0 0
  %1125 = vmatprep.subr.bf16.mxu0 0
  %1126 = vmatpush1.bf16.msra.mxu0 0
  %1127 = vmatprep.subr.bf16.mxu0 0
  %1128 = vmatpush1.bf16.msra.mxu0 0
  %1129 = vmatprep.subr.bf16.mxu0 0
  %1130 = vmatpush1.bf16.msra.mxu0 0
  %1131 = vmatprep.subr.bf16.mxu0 0
  %1132 = vmatpush1.bf16.msra.mxu0 0
  %1133 = vmatprep.mubr.bf16.mxu0 0
  %1134 = vmatmul.mubr.bf16.gmra.mrb[0].mxu0 %v1100
  %v1135 = vpop.f32.mrb[0].mxu0
  %v1136 = vadd.f32 0.0, %v1135
  %v1137 = vpop.f32.mrb[0].mxu0
  %v1138 = vadd.f32 0.0, %v1137
  %v1139 = vpop.f32.mrb[0].mxu0
  %v1140 = vpop.f32.mrb[0].mxu0
  %1141 = vdwg.mxu0
  %1142 = vmatprep.subr.bf16.mxu0 %v441
  %1143 = vmatpush1.bf16.msra.mxu0 %v440
  %1144 = vmatprep.subr.bf16.mxu0 %v445
  %1145 = vmatpush1.bf16.msra.mxu0 %v444
  %1146 = vmatprep.subr.bf16.mxu0 %v449
  %1147 = vmatpush1.bf16.msra.mxu0 %v448
  %1148 = vmatprep.subr.bf16.mxu0 %v453
  %1149 = vmatpush1.bf16.msra.mxu0 %v452
  %1150 = vmatprep.subr.bf16.mxu0 %v457
  %1151 = vmatpush1.bf16.msra.mxu0 %v456
  %1152 = vmatprep.subr.bf16.mxu0 %v461
  %1153 = vmatpush1.bf16.msra.mxu0 %v460
  %1154 = vmatprep.subr.bf16.mxu0 %v465
  %1155 = vmatpush1.bf16.msra.mxu0 %v464
  %1156 = vmatprep.subr.bf16.mxu0 %v469
  %1157 = vmatpush1.bf16.msra.mxu0 %v468
  %1158 = vmatprep.subr.bf16.mxu0 0
  %1159 = vmatpush1.bf16.msra.mxu0 0
  %1160 = vmatprep.subr.bf16.mxu0 0
  %1161 = vmatpush1.bf16.msra.mxu0 0
  %1162 = vmatprep.subr.bf16.mxu0 0
  %1163 = vmatpush1.bf16.msra.mxu0 0
  %1164 = vmatprep.subr.bf16.mxu0 0
  %1165 = vmatpush1.bf16.msra.mxu0 0
  %1166 = vmatprep.subr.bf16.mxu0 0
  %1167 = vmatpush1.bf16.msra.mxu0 0
  %1168 = vmatprep.subr.bf16.mxu0 0
  %1169 = vmatpush1.bf16.msra.mxu0 0
  %1170 = vmatprep.subr.bf16.mxu0 0
  %1171 = vmatpush1.bf16.msra.mxu0 0
  %1172 = vmatprep.subr.bf16.mxu0 0
  %1173 = vmatpush1.bf16.msra.mxu0 0
  %1174 = vmatprep.mubr.bf16.mxu0 0
  %1175 = vmatmul.mubr.bf16.gmra.mrb[0].mxu0 %v1100
  %v1176 = vpop.f32.mrb[0].mxu0
  %v1177 = vadd.f32 0.0, %v1176
  %v1178 = vpop.f32.mrb[0].mxu0
  %v1179 = vadd.f32 0.0, %v1178
  %v1180 = vpop.f32.mrb[0].mxu0
  %v1181 = vpop.f32.mrb[0].mxu0
  %1182 = vdwg.mxu0
  %v1183 = vadd.f32 %v1096, %v1136
  %v1184 = vadd.f32 %v1097, %v1138
  %v1185 = vadd.f32 %v1098, %v1177
  %v1186 = vadd.f32 %v1099, %v1179
  %v1187 = vxor.u32 %v1183, 2147483648
  %v1188 = vmul.f32 %v1187, 1.442695
  %v1189 = vpow.pop %v1188
  %v1190 = vadd.f32 %v1189, 1.0
  %v1191 = vrcp.pop %v1190
  %v1192 = vmul.f32 1.0, %v1191
  %v1193 = vxor.u32 %v1184, 2147483648
  %v1194 = vmul.f32 %v1193, 1.442695
  %v1195 = vpow.pop %v1194
  %v1196 = vadd.f32 %v1195, 1.0
  %v1197 = vrcp.pop %v1196
  %v1198 = vmul.f32 1.0, %v1197
  %v1199 = vtanh.pop %v1185
  %v1200 = vxor.u32 %v1186, 2147483648
  %v1201 = vmul.f32 %v1200, 1.442695
  %v1202 = vpow.pop %v1201
  %v1203 = vadd.f32 %v1202, 1.0
  %v1204 = vrcp.pop %v1203
  %v1205 = vmul.f32 1.0, %v1204
  %v1206 = vmul.f32 %v1198, %v1088
  %v1207 = vmul.f32 %v1192, %v1199
  %v1208 = vadd.f32 %v1206, %v1207
  %v1209 = vtanh.pop %v1208
  %v1210 = vmul.f32 %v1205, %v1209
  %s1211 = scalar_lea.vmem %s6, 40
  %1212 = vst [vmem:[%s1211] sm:$0xff] %v1210
  %s1213 = smul.u32 6, 4
  %s1214 = smul.addr %s1213, 8
  %s1215 = scalar_lea.vmem [#allocation2], %s1214
  %v1216 = vld [vmem:[%s1215] sm:$0xff]
  %v1217 = vld [vmem:[%s1215 + $0x8] sm:$0xff]
  %v1218 = vld [vmem:[%s1215 + $0x10] sm:$0xff]
  %v1219 = vld [vmem:[%s1215 + $0x18] sm:$0xff]
  %v1220 = vpack.c.bf16 %v1210, %v1210
  %1221 = vmatprep.subr.bf16.mxu0 %v439
  %1222 = vmatpush1.bf16.msra.mxu0 %v438
  %1223 = vmatprep.subr.bf16.mxu0 %v443
  %1224 = vmatpush1.bf16.msra.mxu0 %v442
  %1225 = vmatprep.subr.bf16.mxu0 %v447
  %1226 = vmatpush1.bf16.msra.mxu0 %v446
  %1227 = vmatprep.subr.bf16.mxu0 %v451
  %1228 = vmatpush1.bf16.msra.mxu0 %v450
  %1229 = vmatprep.subr.bf16.mxu0 %v455
  %1230 = vmatpush1.bf16.msra.mxu0 %v454
  %1231 = vmatprep.subr.bf16.mxu0 %v459
  %1232 = vmatpush1.bf16.msra.mxu0 %v458
  %1233 = vmatprep.subr.bf16.mxu0 %v463
  %1234 = vmatpush1.bf16.msra.mxu0 %v462
  %1235 = vmatprep.subr.bf16.mxu0 %v467
  %1236 = vmatpush1.bf16.msra.mxu0 %v466
  %1237 = vmatprep.subr.bf16.mxu0 0
  %1238 = vmatpush1.bf16.msra.mxu0 0
  %1239 = vmatprep.subr.bf16.mxu0 0
  %1240 = vmatpush1.bf16.msra.mxu0 0
  %1241 = vmatprep.subr.bf16.mxu0 0
  %1242 = vmatpush1.bf16.msra.mxu0 0
  %1243 = vmatprep.subr.bf16.mxu0 0
  %1244 = vmatpush1.bf16.msra.mxu0 0
  %1245 = vmatprep.subr.bf16.mxu0 0
  %1246 = vmatpush1.bf16.msra.mxu0 0
  %1247 = vmatprep.subr.bf16.mxu0 0
  %1248 = vmatpush1.bf16.msra.mxu0 0
  %1249 = vmatprep.subr.bf16.mxu0 0
  %1250 = vmatpush1.bf16.msra.mxu0 0
  %1251 = vmatprep.subr.bf16.mxu0 0
  %1252 = vmatpush1.bf16.msra.mxu0 0
  %1253 = vmatprep.mubr.bf16.mxu0 0
  %1254 = vmatmul.mubr.bf16.gmra.mrb[0].mxu0 %v1220
  %v1255 = vpop.f32.mrb[0].mxu0
  %v1256 = vadd.f32 0.0, %v1255
  %v1257 = vpop.f32.mrb[0].mxu0
  %v1258 = vadd.f32 0.0, %v1257
  %v1259 = vpop.f32.mrb[0].mxu0
  %v1260 = vpop.f32.mrb[0].mxu0
  %1261 = vdwg.mxu0
  %1262 = vmatprep.subr.bf16.mxu0 %v441
  %1263 = vmatpush1.bf16.msra.mxu0 %v440
  %1264 = vmatprep.subr.bf16.mxu0 %v445
  %1265 = vmatpush1.bf16.msra.mxu0 %v444
  %1266 = vmatprep.subr.bf16.mxu0 %v449
  %1267 = vmatpush1.bf16.msra.mxu0 %v448
  %1268 = vmatprep.subr.bf16.mxu0 %v453
  %1269 = vmatpush1.bf16.msra.mxu0 %v452
  %1270 = vmatprep.subr.bf16.mxu0 %v457
  %1271 = vmatpush1.bf16.msra.mxu0 %v456
  %1272 = vmatprep.subr.bf16.mxu0 %v461
  %1273 = vmatpush1.bf16.msra.mxu0 %v460
  %1274 = vmatprep.subr.bf16.mxu0 %v465
  %1275 = vmatpush1.bf16.msra.mxu0 %v464
  %1276 = vmatprep.subr.bf16.mxu0 %v469
  %1277 = vmatpush1.bf16.msra.mxu0 %v468
  %1278 = vmatprep.subr.bf16.mxu0 0
  %1279 = vmatpush1.bf16.msra.mxu0 0
  %1280 = vmatprep.subr.bf16.mxu0 0
  %1281 = vmatpush1.bf16.msra.mxu0 0
  %1282 = vmatprep.subr.bf16.mxu0 0
  %1283 = vmatpush1.bf16.msra.mxu0 0
  %1284 = vmatprep.subr.bf16.mxu0 0
  %1285 = vmatpush1.bf16.msra.mxu0 0
  %1286 = vmatprep.subr.bf16.mxu0 0
  %1287 = vmatpush1.bf16.msra.mxu0 0
  %1288 = vmatprep.subr.bf16.mxu0 0
  %1289 = vmatpush1.bf16.msra.mxu0 0
  %1290 = vmatprep.subr.bf16.mxu0 0
  %1291 = vmatpush1.bf16.msra.mxu0 0
  %1292 = vmatprep.subr.bf16.mxu0 0
  %1293 = vmatpush1.bf16.msra.mxu0 0
  %1294 = vmatprep.mubr.bf16.mxu0 0
  %1295 = vmatmul.mubr.bf16.gmra.mrb[0].mxu0 %v1220
  %v1296 = vpop.f32.mrb[0].mxu0
  %v1297 = vadd.f32 0.0, %v1296
  %v1298 = vpop.f32.mrb[0].mxu0
  %v1299 = vadd.f32 0.0, %v1298
  %v1300 = vpop.f32.mrb[0].mxu0
  %v1301 = vpop.f32.mrb[0].mxu0
  %1302 = vdwg.mxu0
  %v1303 = vadd.f32 %v1216, %v1256
  %v1304 = vadd.f32 %v1217, %v1258
  %v1305 = vadd.f32 %v1218, %v1297
  %v1306 = vadd.f32 %v1219, %v1299
  %v1307 = vxor.u32 %v1303, 2147483648
  %v1308 = vmul.f32 %v1307, 1.442695
  %v1309 = vpow.pop %v1308
  %v1310 = vadd.f32 %v1309, 1.0
  %v1311 = vrcp.pop %v1310
  %v1312 = vmul.f32 1.0, %v1311
  %v1313 = vxor.u32 %v1304, 2147483648
  %v1314 = vmul.f32 %v1313, 1.442695
  %v1315 = vpow.pop %v1314
  %v1316 = vadd.f32 %v1315, 1.0
  %v1317 = vrcp.pop %v1316
  %v1318 = vmul.f32 1.0, %v1317
  %v1319 = vtanh.pop %v1305
  %v1320 = vxor.u32 %v1306, 2147483648
  %v1321 = vmul.f32 %v1320, 1.442695
  %v1322 = vpow.pop %v1321
  %v1323 = vadd.f32 %v1322, 1.0
  %v1324 = vrcp.pop %v1323
  %v1325 = vmul.f32 1.0, %v1324
  %v1326 = vmul.f32 %v1318, %v1208
  %v1327 = vmul.f32 %v1312, %v1319
  %v1328 = vadd.f32 %v1326, %v1327
  %v1329 = vtanh.pop %v1328
  %v1330 = vmul.f32 %v1325, %v1329
  %s1331 = scalar_lea.vmem %s6, 48
  %1332 = vst [vmem:[%s1331] sm:$0xff] %v1330
  %s1333 = smul.u32 7, 4
  %s1334 = smul.addr %s1333, 8
  %s1335 = scalar_lea.vmem [#allocation2], %s1334
  %v1336 = vld [vmem:[%s1335] sm:$0xff]
  %v1337 = vld [vmem:[%s1335 + $0x8] sm:$0xff]
  %v1338 = vld [vmem:[%s1335 + $0x10] sm:$0xff]
  %v1339 = vld [vmem:[%s1335 + $0x18] sm:$0xff]
  %v1340 = vpack.c.bf16 %v1330, %v1330
  %1341 = vmatprep.subr.bf16.mxu0 %v439
  %1342 = vmatpush1.bf16.msra.mxu0 %v438
  %1343 = vmatprep.subr.bf16.mxu0 %v443
  %1344 = vmatpush1.bf16.msra.mxu0 %v442
  %1345 = vmatprep.subr.bf16.mxu0 %v447
  %1346 = vmatpush1.bf16.msra.mxu0 %v446
  %1347 = vmatprep.subr.bf16.mxu0 %v451
  %1348 = vmatpush1.bf16.msra.mxu0 %v450
  %1349 = vmatprep.subr.bf16.mxu0 %v455
  %1350 = vmatpush1.bf16.msra.mxu0 %v454
  %1351 = vmatprep.subr.bf16.mxu0 %v459
  %1352 = vmatpush1.bf16.msra.mxu0 %v458
  %1353 = vmatprep.subr.bf16.mxu0 %v463
  %1354 = vmatpush1.bf16.msra.mxu0 %v462
  %1355 = vmatprep.subr.bf16.mxu0 %v467
  %1356 = vmatpush1.bf16.msra.mxu0 %v466
  %1357 = vmatprep.subr.bf16.mxu0 0
  %1358 = vmatpush1.bf16.msra.mxu0 0
  %1359 = vmatprep.subr.bf16.mxu0 0
  %1360 = vmatpush1.bf16.msra.mxu0 0
  %1361 = vmatprep.subr.bf16.mxu0 0
  %1362 = vmatpush1.bf16.msra.mxu0 0
  %1363 = vmatprep.subr.bf16.mxu0 0
  %1364 = vmatpush1.bf16.msra.mxu0 0
  %1365 = vmatprep.subr.bf16.mxu0 0
  %1366 = vmatpush1.bf16.msra.mxu0 0
  %1367 = vmatprep.subr.bf16.mxu0 0
  %1368 = vmatpush1.bf16.msra.mxu0 0
  %1369 = vmatprep.subr.bf16.mxu0 0
  %1370 = vmatpush1.bf16.msra.mxu0 0
  %1371 = vmatprep.subr.bf16.mxu0 0
  %1372 = vmatpush1.bf16.msra.mxu0 0
  %1373 = vmatprep.mubr.bf16.mxu0 0
  %1374 = vmatmul.mubr.bf16.gmra.mrb[0].mxu0 %v1340
  %v1375 = vpop.f32.mrb[0].mxu0
  %v1376 = vadd.f32 0.0, %v1375
  %v1377 = vpop.f32.mrb[0].mxu0
  %v1378 = vadd.f32 0.0, %v1377
  %v1379 = vpop.f32.mrb[0].mxu0
  %v1380 = vpop.f32.mrb[0].mxu0
  %1381 = vdwg.mxu0
  %1382 = vmatprep.subr.bf16.mxu0 %v441
  %1383 = vmatpush1.bf16.msra.mxu0 %v440
  %1384 = vmatprep.subr.bf16.mxu0 %v445
  %1385 = vmatpush1.bf16.msra.mxu0 %v444
  %1386 = vmatprep.subr.bf16.mxu0 %v449
  %1387 = vmatpush1.bf16.msra.mxu0 %v448
  %1388 = vmatprep.subr.bf16.mxu0 %v453
  %1389 = vmatpush1.bf16.msra.mxu0 %v452
  %1390 = vmatprep.subr.bf16.mxu0 %v457
  %1391 = vmatpush1.bf16.msra.mxu0 %v456
  %1392 = vmatprep.subr.bf16.mxu0 %v461
  %1393 = vmatpush1.bf16.msra.mxu0 %v460
  %1394 = vmatprep.subr.bf16.mxu0 %v465
  %1395 = vmatpush1.bf16.msra.mxu0 %v464
  %1396 = vmatprep.subr.bf16.mxu0 %v469
  %1397 = vmatpush1.bf16.msra.mxu0 %v468
  %1398 = vmatprep.subr.bf16.mxu0 0
  %1399 = vmatpush1.bf16.msra.mxu0 0
  %1400 = vmatprep.subr.bf16.mxu0 0
  %1401 = vmatpush1.bf16.msra.mxu0 0
  %1402 = vmatprep.subr.bf16.mxu0 0
  %1403 = vmatpush1.bf16.msra.mxu0 0
  %1404 = vmatprep.subr.bf16.mxu0 0
  %1405 = vmatpush1.bf16.msra.mxu0 0
  %1406 = vmatprep.subr.bf16.mxu0 0
  %1407 = vmatpush1.bf16.msra.mxu0 0
  %1408 = vmatprep.subr.bf16.mxu0 0
  %1409 = vmatpush1.bf16.msra.mxu0 0
  %1410 = vmatprep.subr.bf16.mxu0 0
  %1411 = vmatpush1.bf16.msra.mxu0 0
  %1412 = vmatprep.subr.bf16.mxu0 0
  %1413 = vmatpush1.bf16.msra.mxu0 0
  %1414 = vmatprep.mubr.bf16.mxu0 0
  %1415 = vmatmul.mubr.bf16.gmra.mrb[0].mxu0 %v1340
  %v1416 = vpop.f32.mrb[0].mxu0
  %v1417 = vadd.f32 0.0, %v1416
  %v1418 = vpop.f32.mrb[0].mxu0
  %v1419 = vadd.f32 0.0, %v1418
  %v1420 = vpop.f32.mrb[0].mxu0
  %v1421 = vpop.f32.mrb[0].mxu0
  %1422 = vdwg.mxu0
  %v1423 = vadd.f32 %v1336, %v1376
  %v1424 = vadd.f32 %v1337, %v1378
  %v1425 = vadd.f32 %v1338, %v1417
  %v1426 = vadd.f32 %v1339, %v1419
  %v1427 = vxor.u32 %v1423, 2147483648
  %v1428 = vmul.f32 %v1427, 1.442695
  %v1429 = vpow.pop %v1428
  %v1430 = vadd.f32 %v1429, 1.0
  %v1431 = vrcp.pop %v1430
  %v1432 = vmul.f32 1.0, %v1431
  %v1433 = vxor.u32 %v1424, 2147483648
  %v1434 = vmul.f32 %v1433, 1.442695
  %v1435 = vpow.pop %v1434
  %v1436 = vadd.f32 %v1435, 1.0
  %v1437 = vrcp.pop %v1436
  %v1438 = vmul.f32 1.0, %v1437
  %v1439 = vtanh.pop %v1425
  %v1440 = vxor.u32 %v1426, 2147483648
  %v1441 = vmul.f32 %v1440, 1.442695
  %v1442 = vpow.pop %v1441
  %v1443 = vadd.f32 %v1442, 1.0
  %v1444 = vrcp.pop %v1443
  %v1445 = vmul.f32 1.0, %v1444
  %v1446 = vmul.f32 %v1438, %v1328
  %v1447 = vmul.f32 %v1432, %v1439
  %v1448 = vadd.f32 %v1446, %v1447
  %v1449 = vtanh.pop %v1448
  %v1450 = vmul.f32 %v1445, %v1449
  %s1451 = scalar_lea.vmem %s6, 56
  %1452 = vst [vmem:[%s1451] sm:$0xff] %v1450
  %1453 = vst [vmem:[#allocation3] sm:$0xff] %v1450
  %1454 = vst [vmem:[#allocation4] sm:$0xff] %v1448
  %1455 = vst [vmem:[%s7] sm:$0xff] %v1450
  %1456 = vst [vmem:[%s8] sm:$0xff] %v1448
  // Predicated region
  $region30: #{rnn_forward.2} parent=0 // pred_check
    _
  $region31: #{rnn_forward.2} parent=0 // pred_check_branch
    %1458 = sbr.rel (0) target = $region33
  $region32: #{rnn_forward.2} parent=0 // pred_region
    _
  $region33: #{rnn_forward.2} parent=0 // pred_fallthru
    _
  // Predicated region
  $region34: #{rnn_forward.2} parent=0 // pred_check
    _
  $region35: #{rnn_forward.2} parent=0 // pred_check_branch
    %1460 = sbr.rel (0) target = $region37
  $region36: #{rnn_forward.2} parent=0 // pred_region
    _
  $region37: #{rnn_forward.2} parent=0 // pred_fallthru
    _
  // Predicated region
  $region38: #{rnn_forward.2} parent=0 // pred_check
    _
  $region39: #{rnn_forward.2} parent=0 // pred_check_branch
    %1462 = sbr.rel (0) target = $region41
  $region40: #{rnn_forward.2} parent=0 // pred_region
    _
  $region41: #{rnn_forward.2} parent=0 // pred_fallthru
    _
  // Predicated region
  $region42: #{rnn_forward.2} parent=0 // pred_check
    _
  $region43: #{rnn_forward.2} parent=0 // pred_check_branch
    %1464 = sbr.rel (0) target = $region45
  $region44: #{rnn_forward.2} parent=0 // pred_region
    _
  $region45: #{rnn_forward.2} parent=0 // pred_fallthru
    _
  // Predicated region
  $region46: #{rnn_forward.2} parent=0 // pred_check
    _
  $region47: #{rnn_forward.2} parent=0 // pred_check_branch
    %1466 = sbr.rel (0) target = $region49
  $region48: #{rnn_forward.2} parent=0 // pred_region
    _
  $region49: #{rnn_forward.2} parent=0 // pred_fallthru
    _
  // Predicated region
  $region50: #{rnn_forward.2} parent=0 // pred_check
    _
  $region51: #{rnn_forward.2} parent=0 // pred_check_branch
    %1468 = sbr.rel (0) target = $region53
  $region52: #{rnn_forward.2} parent=0 // pred_region
    _
  $region53: #{rnn_forward.2} parent=0 // pred_fallthru
    _

</llo_original>
